<compile_context>
chip_gen: v5e
topology: v5e:2x2
jax: 0.10.0
libtpu: 0.0.40
codegen_flags: <defaults>
</compile_context>

<pallas_src>
import functools

import jax
import jax.numpy as jnp
import numpy as np
from jax.experimental import pallas as pl
from jax.experimental.pallas import tpu as pltpu

# --- problem sizes (small, consistent with the module) ---
BATCH = 2
N_FEAT = 16          # channels
REDUCTION = 4        # n_feat // reduction = 4
KSIZE = 3            # 3x3 convs, padding = 1 (RCAN default_conv)
H = 16
W = 16


def rcab_kernel(x_ref, wb1_ref, b1_ref, wb2_hbm, b2_ref,
                wd_ref, bd_ref, wu_ref, bu_ref, gat_ref, sct_ref,
                out_ref, wb2_vmem, wb2_sem, *, H, W, C):
    f32 = jnp.float32
    WC = W * C
    HP = H + 2          # conv1 output rows: one (masked) halo row on each side

    # Kick off the conv2 band-weight DMA so it overlaps conv1's compute.
    wb2_cp = pltpu.make_async_copy(wb2_hbm, wb2_vmem, wb2_sem)
    wb2_cp.start()

    # (H+4, WC); rows 0,1 and H+2,H+3 are zero halo rows.
    x_f = x_ref[...].astype(f32)

    def conv3x3(inp, rows, w_ref, bias):
        # Per-kh accumulation: three (rows, WC) @ (WC, WC) MXU matmuls against
        # the banded weight (kw taps / channels / W-padding folded host-side).
        # Mosaic's default f32 matmul (multi-pass bf16) is within the 1e-4
        # tolerance at these magnitudes.
        acc = jnp.dot(inp[0:rows, :], w_ref[0:WC, :], preferred_element_type=f32)
        for kh in (1, 2):
            acc = acc + jnp.dot(inp[kh:kh + rows, :],
                                w_ref[kh * WC:(kh + 1) * WC, :],
                                preferred_element_type=f32)
        return acc + bias

    # ---- conv1 (+bias, ReLU) on H+2 rows; halo rows zeroed so they double as
    # conv2's zero padding (no padded VMEM scratch roundtrip). ----
    h1 = jnp.maximum(conv3x3(x_f, HP, wb1_ref, b1_ref[...]), 0.0)      # (HP, WC)
    rowl = jax.lax.broadcasted_iota(jnp.int32, (HP, 1), 0)
    h1 = jnp.where((rowl >= 1) & (rowl <= H), h1, 0.0)

    # ---- conv2 (+bias) on the H valid rows (wait on its weight DMA first) ----
    wb2_cp.wait()
    res = conv3x3(h1, H, wb2_vmem, b2_ref[...])                        # (H, WC)

    # ---- CALayer: global avg pool -> 1x1 down + ReLU -> 1x1 up + sigmoid ----
    # gather matrix has the 1/(H*W) pooling scale folded in (host-side).
    pooled = jnp.dot(res, gat_ref[...], preferred_element_type=f32)    # (H, C)
    y = jnp.sum(pooled, axis=0, keepdims=True)                         # (1, C)
    z = jnp.maximum(
        jnp.dot(y, wd_ref[...], preferred_element_type=f32) + bd_ref[...], 0.0)
    s = jax.nn.sigmoid(
        jnp.dot(z, wu_ref[...], preferred_element_type=f32) + bu_ref[...])  # (1, C)
    s_lane = jnp.dot(s, sct_ref[...], preferred_element_type=f32)      # (1, WC)

    # ---- channel scaling + residual add (residual read from x_f interior) ----
    out = res * s_lane + x_f[2:2 + H, :]
    out_ref[...] = out.astype(out_ref.dtype)           # dense (H, 256) store


def _band_weight(w_hwio, width):
    """Fold a (3,3,Cin,Cout) HWIO 3x3 kernel into a (3*W*Cin, W*Cout) banded
    matrix so each kh tap of the conv (kw taps + channels + zero padding in W)
    becomes one matmul on (rows, W*Cin) lane-dense activations. Host-side, once."""
    kh, kw_, cin, cout = w_hwio.shape
    w_np = np.asarray(w_hwio, dtype=np.float32)
    band = np.zeros((kh, width, cin, width, cout), np.float32)
    for w in range(width):
        for kw in range(kw_):
            wj = w + kw - 1                      # input column feeding output w
            if 0 <= wj < width:
                band[:, wj, :, w, :] = w_np[:, kw, :, :]
    return jnp.asarray(band.reshape(kh * width * cin, width * cout))


def prepare_params(params, height, width):
    """One-time host-side parameter prep (banded weights, bias tiles,
    channel gather/scatter matrices). Reused across jitted forward calls."""
    w1, b1, w2, b2, wd, bd, wu, bu = params
    C = w1.shape[2]
    WC = width * C
    wb1 = _band_weight(w1, width)                       # (3*WC, WC)
    wb2 = _band_weight(w2, width)
    b1t = jnp.tile(jnp.reshape(b1, (1, C)), (1, width))  # (1, WC): lane j -> b[j % C]
    b2t = jnp.tile(jnp.reshape(b2, (1, C)), (1, width))
    lanes = np.arange(WC)
    chans = np.arange(C)
    # lane j -> channel j % C, with the 1/(H*W) pooling scale folded in
    gather_c = (lanes[:, None] % C == chans[None, :]).astype(np.float32)
    gather_c = gather_c * (1.0 / (height * width))
    scatter_c = (chans[:, None] == lanes[None, :] % C).astype(np.float32)
    return (wb1, b1t, wb2, b2t,
            jnp.asarray(wd), jnp.asarray(bd), jnp.asarray(wu), jnp.asarray(bu),
            jnp.asarray(gather_c), jnp.asarray(scatter_c))


@jax.jit
def rcab_forward(x_nhwc, prep):
    wb1, b1t, wb2, b2t, wd, bd, wu, bu, gat, sct = prep
    N, Hh, Ww, C = x_nhwc.shape
    WC = Ww * C

    # single lane-dense input: (N, H+4, W*C) with 2 zero halo rows per side
    x_pad = jnp.pad(x_nhwc.reshape(N, Hh, WC), ((0, 0), (2, 2), (0, 0)))

    def const_spec(a):
        nd = a.ndim
        return pl.BlockSpec(a.shape, lambda i, _nd=nd: (0,) * _nd)

    in_specs = [
        pl.BlockSpec((None, Hh + 4, WC), lambda i: (i, 0, 0)),   # x: one image/step
        const_spec(wb1),                                         # resident band 1
        const_spec(b1t),
        pl.BlockSpec(memory_space=pl.ANY),                       # wb2: manual DMA
        const_spec(b2t),
        const_spec(wd), const_spec(bd), const_spec(wu), const_spec(bu),
        const_spec(gat), const_spec(sct),
    ]

    out = pl.pallas_call(
        functools.partial(rcab_kernel, H=Hh, W=Ww, C=C),
        out_shape=jax.ShapeDtypeStruct((N, Hh, WC), jnp.float32),
        grid_spec=pltpu.PrefetchScalarGridSpec(
            num_scalar_prefetch=0,
            grid=(N,),                                   # one image per step
            in_specs=in_specs,
            out_specs=pl.BlockSpec((None, Hh, WC), lambda i: (i, 0, 0)),
            scratch_shapes=[
                pltpu.VMEM((3 * WC, WC), jnp.float32),   # wb2 landing buffer
                pltpu.SemaphoreType.DMA(()),
            ],
        ),
        compiler_params=pltpu.CompilerParams(
            dimension_semantics=("parallel",)),          # both TCs on v7x
    )(x_pad, wb1, b1t, wb2, b2t, wd, bd, wu, bu, gat, sct)
    return out.reshape(N, Hh, Ww, C)


def rcab_reference(x_nhwc, params):
    """Pure-JAX reference (NHWC), same math as the PyTorch module."""
    w1, b1, w2, b2, wd, bd, wu, bu = params
    dn = ('NHWC', 'HWIO', 'NHWC')
    h1 = jax.lax.conv_general_dilated(x_nhwc, w1, (1, 1), 'SAME',
                                      dimension_numbers=dn) + b1.reshape(1, 1, 1, -1)
    h1 = jnp.maximum(h1, 0.0)
    res = jax.lax.conv_general_dilated(h1, w2, (1, 1), 'SAME',
                                       dimension_numbers=dn) + b2.reshape(1, 1, 1, -1)
    y = jnp.mean(res, axis=(1, 2))                        # (N, C)
    z = jnp.maximum(y @ wd + bd, 0.0)
    s = jax.nn.sigmoid(z @ wu + bu)
    return res * s[:, None, None, :] + x_nhwc


def make_params(key):
    C, Cr = N_FEAT, N_FEAT // REDUCTION
    ks = jax.random.split(key, 8)
    w1 = 0.1 * jax.random.normal(ks[0], (KSIZE, KSIZE, C, C), jnp.float32)   # HWIO
    b1 = 0.1 * jax.random.normal(ks[1], (1, C), jnp.float32)
    w2 = 0.1 * jax.random.normal(ks[2], (KSIZE, KSIZE, C, C), jnp.float32)
    b2 = 0.1 * jax.random.normal(ks[3], (1, C), jnp.float32)
    wd = 0.1 * jax.random.normal(ks[4], (C, Cr), jnp.float32)                # 1x1 conv down
    bd = 0.1 * jax.random.normal(ks[5], (1, Cr), jnp.float32)
    wu = 0.1 * jax.random.normal(ks[6], (Cr, C), jnp.float32)                # 1x1 conv up
    bu = 0.1 * jax.random.normal(ks[7], (1, C), jnp.float32)
    return (w1, b1, w2, b2, wd, bd, wu, bu)


if __name__ == "__main__":
    key = jax.random.PRNGKey(0)
    kx, kp = jax.random.split(key)
    x = jax.random.normal(kx, (BATCH, H, W, N_FEAT), jnp.float32)   # NHWC
    params = make_params(kp)
    prep = prepare_params(params, H, W)                             # cached host prep

    out = jax.block_until_ready(rcab_forward(x, prep))
    ref = jax.block_until_ready(rcab_reference(x, params))

    assert out.shape == (BATCH, H, W, N_FEAT)
    err = jnp.max(jnp.abs(out - ref))
    assert jnp.allclose(out, ref, rtol=1e-4, atol=1e-4), f"max abs err {err}"
    print("KERNEL_OK")
</pallas_src>

<mosaic_0001>
module attributes {stable_mosaic.version = 11 : i64} {
  func.func @rcab_kernel(%arg0: i32, %arg1: memref<1x20x256xf32, #tpu.memory_space<vmem>>, %arg2: memref<768x256xf32, #tpu.memory_space<vmem>>, %arg3: memref<1x256xf32, #tpu.memory_space<vmem>>, %arg4: memref<768x256xf32, #tpu.memory_space<any>>, %arg5: memref<1x256xf32, #tpu.memory_space<vmem>>, %arg6: memref<16x4xf32, #tpu.memory_space<vmem>>, %arg7: memref<1x4xf32, #tpu.memory_space<vmem>>, %arg8: memref<4x16xf32, #tpu.memory_space<vmem>>, %arg9: memref<1x16xf32, #tpu.memory_space<vmem>>, %arg10: memref<256x16xf32, #tpu.memory_space<vmem>>, %arg11: memref<16x256xf32, #tpu.memory_space<vmem>>, %arg12: memref<1x16x256xf32, #tpu.memory_space<vmem>>, %arg13: memref<768x256xf32, #tpu.memory_space<vmem>>, %arg14: memref<!tpu.dma_semaphore, #tpu.memory_space<semaphore_mem>>) attributes {dimension_semantics = [#tpu.dimension_semantics<parallel>], iteration_bounds = array<i64: 2>, scalar_prefetch = 0 : i64, scratch_operands = 2 : i64, tpu.core_type = #tpu.core_type<tc>, window_params = [{transform_indices = @transform_0, window_bounds = array<i64: 1, 20, 256>}, {pipeline_mode = #tpu.pipeline_mode<synchronous>, transform_indices = @transform_1, window_bounds = array<i64: 768, 256>}, {pipeline_mode = #tpu.pipeline_mode<synchronous>, transform_indices = @transform_2, window_bounds = array<i64: 1, 256>}, {}, {pipeline_mode = #tpu.pipeline_mode<synchronous>, transform_indices = @transform_4, window_bounds = array<i64: 1, 256>}, {pipeline_mode = #tpu.pipeline_mode<synchronous>, transform_indices = @transform_5, window_bounds = array<i64: 16, 4>}, {pipeline_mode = #tpu.pipeline_mode<synchronous>, transform_indices = @transform_6, window_bounds = array<i64: 1, 4>}, {pipeline_mode = #tpu.pipeline_mode<synchronous>, transform_indices = @transform_7, window_bounds = array<i64: 4, 16>}, {pipeline_mode = #tpu.pipeline_mode<synchronous>, transform_indices = @transform_8, window_bounds = array<i64: 1, 16>}, {pipeline_mode = #tpu.pipeline_mode<synchronous>, transform_indices = @transform_9, window_bounds = array<i64: 256, 16>}, {pipeline_mode = #tpu.pipeline_mode<synchronous>, transform_indices = @transform_10, window_bounds = array<i64: 16, 256>}, {transform_indices = @transform_11, window_bounds = array<i64: 1, 16, 256>}]} {
    tpu.enqueue_dma source(%arg4 : memref<768x256xf32, #tpu.memory_space<any>>) target(%arg13 : memref<768x256xf32, #tpu.memory_space<vmem>>) target_semaphore(%arg14 : memref<!tpu.dma_semaphore, #tpu.memory_space<semaphore_mem>>)
    %c0 = arith.constant 0 : index
    %c0_0 = arith.constant 0 : index
    %c0_1 = arith.constant 0 : index
    %0 = vector.load %arg1[%c0, %c0_0, %c0_1] : memref<1x20x256xf32, #tpu.memory_space<vmem>>, vector<1x20x256xf32>
    %1 = vector.shape_cast %0 : vector<1x20x256xf32> to vector<20x256xf32>
    %c0_2 = arith.constant 0 : index
    %c0_3 = arith.constant 0 : index
    %2 = vector.load %arg3[%c0_2, %c0_3] : memref<1x256xf32, #tpu.memory_space<vmem>>, vector<1x256xf32>
    %3 = vector.extract_strided_slice %1 {offsets = [0, 0], sizes = [18, 256], strides = [1, 1]} : vector<20x256xf32> to vector<18x256xf32>
    %c0_4 = arith.constant 0 : index
    %c0_5 = arith.constant 0 : index
    %4 = vector.load %arg2[%c0_4, %c0_5] : memref<768x256xf32, #tpu.memory_space<vmem>>, vector<256x256xf32>
    %cst = arith.constant dense<0.000000e+00> : vector<18x256xf32>
    %5 = tpu.matmul %3, %4, %cst {dimension_numbers = #tpu.dot_dimension_numbers<[1], [0], [0], [1], [0, 0, 1, 1], [], []>} : vector<18x256xf32>, vector<256x256xf32>, vector<18x256xf32> -> vector<18x256xf32>
    %6 = vector.extract_strided_slice %1 {offsets = [1, 0], sizes = [18, 256], strides = [1, 1]} : vector<20x256xf32> to vector<18x256xf32>
    %c256 = arith.constant 256 : index
    %c0_6 = arith.constant 0 : index
    %7 = vector.load %arg2[%c256, %c0_6] : memref<768x256xf32, #tpu.memory_space<vmem>>, vector<256x256xf32>
    %cst_7 = arith.constant dense<0.000000e+00> : vector<18x256xf32>
    %8 = tpu.matmul %6, %7, %cst_7 {dimension_numbers = #tpu.dot_dimension_numbers<[1], [0], [0], [1], [0, 0, 1, 1], [], []>} : vector<18x256xf32>, vector<256x256xf32>, vector<18x256xf32> -> vector<18x256xf32>
    %9 = arith.addf %5, %8 : vector<18x256xf32>
    %10 = vector.extract_strided_slice %1 {offsets = [2, 0], sizes = [18, 256], strides = [1, 1]} : vector<20x256xf32> to vector<18x256xf32>
    %c512 = arith.constant 512 : index
    %c0_8 = arith.constant 0 : index
    %11 = vector.load %arg2[%c512, %c0_8] : memref<768x256xf32, #tpu.memory_space<vmem>>, vector<256x256xf32>
    %cst_9 = arith.constant dense<0.000000e+00> : vector<18x256xf32>
    %12 = tpu.matmul %10, %11, %cst_9 {dimension_numbers = #tpu.dot_dimension_numbers<[1], [0], [0], [1], [0, 0, 1, 1], [], []>} : vector<18x256xf32>, vector<256x256xf32>, vector<18x256xf32> -> vector<18x256xf32>
    %13 = arith.addf %9, %12 : vector<18x256xf32>
    %14 = vector.broadcast %2 : vector<1x256xf32> to vector<18x256xf32>
    %15 = arith.addf %13, %14 : vector<18x256xf32>
    %cst_10 = arith.constant 0.000000e+00 : f32
    %16 = vector.broadcast %cst_10 : f32 to vector<18x256xf32>
    %17 = arith.maximumf %15, %16 : vector<18x256xf32>
    %18 = tpu.iota {dimensions = array<i32: 0>} : vector<18x1xi32>
    %c1_i32 = arith.constant 1 : i32
    %19 = vector.broadcast %c1_i32 : i32 to vector<18x1xi32>
    %20 = arith.cmpi sge, %18, %19 : vector<18x1xi32>
    %c16_i32 = arith.constant 16 : i32
    %21 = vector.broadcast %c16_i32 : i32 to vector<18x1xi32>
    %22 = arith.cmpi sle, %18, %21 : vector<18x1xi32>
    %23 = arith.andi %20, %22 : vector<18x1xi1>
    %cst_11 = arith.constant 0.000000e+00 : f32
    %24 = vector.shape_cast %23 : vector<18x1xi1> to vector<18x1xi1>
    %25 = vector.broadcast %24 : vector<18x1xi1> to vector<18x256xi1>
    %26 = vector.broadcast %cst_11 : f32 to vector<18x256xf32>
    %27 = arith.select %25, %17, %26 : vector<18x256xi1>, vector<18x256xf32>
    tpu.wait_dma2 semaphore(%arg14 : memref<!tpu.dma_semaphore, #tpu.memory_space<semaphore_mem>>) src(%arg4 : memref<768x256xf32, #tpu.memory_space<any>>) dst(%arg13 : memref<768x256xf32, #tpu.memory_space<vmem>>)
    %c0_12 = arith.constant 0 : index
    %c0_13 = arith.constant 0 : index
    %28 = vector.load %arg5[%c0_12, %c0_13] : memref<1x256xf32, #tpu.memory_space<vmem>>, vector<1x256xf32>
    %29 = vector.extract_strided_slice %27 {offsets = [0, 0], sizes = [16, 256], strides = [1, 1]} : vector<18x256xf32> to vector<16x256xf32>
    %c0_14 = arith.constant 0 : index
    %c0_15 = arith.constant 0 : index
    %30 = vector.load %arg13[%c0_14, %c0_15] : memref<768x256xf32, #tpu.memory_space<vmem>>, vector<256x256xf32>
    %cst_16 = arith.constant dense<0.000000e+00> : vector<16x256xf32>
    %31 = tpu.matmul %29, %30, %cst_16 {dimension_numbers = #tpu.dot_dimension_numbers<[1], [0], [0], [1], [0, 0, 1, 1], [], []>} : vector<16x256xf32>, vector<256x256xf32>, vector<16x256xf32> -> vector<16x256xf32>
    %32 = vector.extract_strided_slice %27 {offsets = [1, 0], sizes = [16, 256], strides = [1, 1]} : vector<18x256xf32> to vector<16x256xf32>
    %c256_17 = arith.constant 256 : index
    %c0_18 = arith.constant 0 : index
    %33 = vector.load %arg13[%c256_17, %c0_18] : memref<768x256xf32, #tpu.memory_space<vmem>>, vector<256x256xf32>
    %cst_19 = arith.constant dense<0.000000e+00> : vector<16x256xf32>
    %34 = tpu.matmul %32, %33, %cst_19 {dimension_numbers = #tpu.dot_dimension_numbers<[1], [0], [0], [1], [0, 0, 1, 1], [], []>} : vector<16x256xf32>, vector<256x256xf32>, vector<16x256xf32> -> vector<16x256xf32>
    %35 = arith.addf %31, %34 : vector<16x256xf32>
    %36 = vector.extract_strided_slice %27 {offsets = [2, 0], sizes = [16, 256], strides = [1, 1]} : vector<18x256xf32> to vector<16x256xf32>
    %c512_20 = arith.constant 512 : index
    %c0_21 = arith.constant 0 : index
    %37 = vector.load %arg13[%c512_20, %c0_21] : memref<768x256xf32, #tpu.memory_space<vmem>>, vector<256x256xf32>
    %cst_22 = arith.constant dense<0.000000e+00> : vector<16x256xf32>
    %38 = tpu.matmul %36, %37, %cst_22 {dimension_numbers = #tpu.dot_dimension_numbers<[1], [0], [0], [1], [0, 0, 1, 1], [], []>} : vector<16x256xf32>, vector<256x256xf32>, vector<16x256xf32> -> vector<16x256xf32>
    %39 = arith.addf %35, %38 : vector<16x256xf32>
    %40 = vector.broadcast %28 : vector<1x256xf32> to vector<16x256xf32>
    %41 = arith.addf %39, %40 : vector<16x256xf32>
    %c0_23 = arith.constant 0 : index
    %c0_24 = arith.constant 0 : index
    %42 = vector.load %arg10[%c0_23, %c0_24] : memref<256x16xf32, #tpu.memory_space<vmem>>, vector<256x16xf32>
    %cst_25 = arith.constant dense<0.000000e+00> : vector<16x16xf32>
    %43 = tpu.matmul %41, %42, %cst_25 {dimension_numbers = #tpu.dot_dimension_numbers<[1], [0], [0], [1], [0, 0, 1, 1], [], []>} : vector<16x256xf32>, vector<256x16xf32>, vector<16x16xf32> -> vector<16x16xf32>
    %cst_26 = arith.constant dense<0.000000e+00> : vector<16xf32>
    %44 = vector.multi_reduction <add>, %43, %cst_26 [0] : vector<16x16xf32> to vector<16xf32>
    %45 = vector.shape_cast %44 : vector<16xf32> to vector<1x16xf32>
    %c0_27 = arith.constant 0 : index
    %c0_28 = arith.constant 0 : index
    %46 = vector.load %arg6[%c0_27, %c0_28] : memref<16x4xf32, #tpu.memory_space<vmem>>, vector<16x4xf32>
    %cst_29 = arith.constant dense<0.000000e+00> : vector<1x4xf32>
    %47 = tpu.matmul %45, %46, %cst_29 {dimension_numbers = #tpu.dot_dimension_numbers<[1], [0], [0], [1], [0, 0, 1, 1], [], []>} : vector<1x16xf32>, vector<16x4xf32>, vector<1x4xf32> -> vector<1x4xf32>
    %c0_30 = arith.constant 0 : index
    %c0_31 = arith.constant 0 : index
    %48 = vector.load %arg7[%c0_30, %c0_31] : memref<1x4xf32, #tpu.memory_space<vmem>>, vector<1x4xf32>
    %49 = arith.addf %47, %48 : vector<1x4xf32>
    %cst_32 = arith.constant 0.000000e+00 : f32
    %50 = vector.broadcast %cst_32 : f32 to vector<1x4xf32>
    %51 = arith.maximumf %49, %50 : vector<1x4xf32>
    %c0_33 = arith.constant 0 : index
    %c0_34 = arith.constant 0 : index
    %52 = vector.load %arg8[%c0_33, %c0_34] : memref<4x16xf32, #tpu.memory_space<vmem>>, vector<4x16xf32>
    %cst_35 = arith.constant dense<0.000000e+00> : vector<1x16xf32>
    %53 = tpu.matmul %51, %52, %cst_35 {dimension_numbers = #tpu.dot_dimension_numbers<[1], [0], [0], [1], [0, 0, 1, 1], [], []>} : vector<1x4xf32>, vector<4x16xf32>, vector<1x16xf32> -> vector<1x16xf32>
    %c0_36 = arith.constant 0 : index
    %c0_37 = arith.constant 0 : index
    %54 = vector.load %arg9[%c0_36, %c0_37] : memref<1x16xf32, #tpu.memory_space<vmem>>, vector<1x16xf32>
    %55 = arith.addf %53, %54 : vector<1x16xf32>
    %56 = arith.negf %55 : vector<1x16xf32>
    %57 = math.exp %56 : vector<1x16xf32>
    %cst_38 = arith.constant 1.000000e+00 : f32
    %58 = vector.broadcast %cst_38 : f32 to vector<1x16xf32>
    %59 = arith.addf %58, %57 : vector<1x16xf32>
    %60 = arith.divf %58, %59 : vector<1x16xf32>
    %c0_39 = arith.constant 0 : index
    %c0_40 = arith.constant 0 : index
    %61 = vector.load %arg11[%c0_39, %c0_40] : memref<16x256xf32, #tpu.memory_space<vmem>>, vector<16x256xf32>
    %cst_41 = arith.constant dense<0.000000e+00> : vector<1x256xf32>
    %62 = tpu.matmul %60, %61, %cst_41 {dimension_numbers = #tpu.dot_dimension_numbers<[1], [0], [0], [1], [0, 0, 1, 1], [], []>} : vector<1x16xf32>, vector<16x256xf32>, vector<1x256xf32> -> vector<1x256xf32>
    %63 = vector.broadcast %62 : vector<1x256xf32> to vector<16x256xf32>
    %64 = arith.mulf %41, %63 : vector<16x256xf32>
    %65 = vector.extract_strided_slice %1 {offsets = [2, 0], sizes = [16, 256], strides = [1, 1]} : vector<20x256xf32> to vector<16x256xf32>
    %66 = arith.addf %64, %65 : vector<16x256xf32>
    %c0_42 = arith.constant 0 : index
    %c0_43 = arith.constant 0 : index
    %c0_44 = arith.constant 0 : index
    %67 = vector.load %arg12[%c0_42, %c0_43, %c0_44] : memref<1x16x256xf32, #tpu.memory_space<vmem>>, vector<1x16x256xf32>
    %68 = vector.shape_cast %67 : vector<1x16x256xf32> to vector<16x256xf32>
    %69 = vector.shape_cast %66 : vector<16x256xf32> to vector<1x16x256xf32>
    tpu.vector_store %arg12[%c0_42, %c0_43, %c0_44], %69 {strides = array<i32>} : memref<1x16x256xf32, #tpu.memory_space<vmem>>, vector<1x16x256xf32>,
    return
  }
  func.func @transform_0(%arg0: i32) -> (i32, i32, i32) {
    %c0_i32 = arith.constant 0 : i32
    %c0_i32_0 = arith.constant 0 : i32
    %c0_i32_1 = arith.constant 0 : i32
    return %arg0, %c0_i32, %c0_i32_0 : i32, i32, i32
  }
  func.func @transform_1(%arg0: i32) -> (i32, i32) {
    %c0_i32 = arith.constant 0 : i32
    %c0_i32_0 = arith.constant 0 : i32
    %c0_i32_1 = arith.constant 0 : i32
    return %c0_i32, %c0_i32_0 : i32, i32
  }
  func.func @transform_2(%arg0: i32) -> (i32, i32) {
    %c0_i32 = arith.constant 0 : i32
    %c0_i32_0 = arith.constant 0 : i32
    %c0_i32_1 = arith.constant 0 : i32
    return %c0_i32, %c0_i32_0 : i32, i32
  }
  func.func @transform_4(%arg0: i32) -> (i32, i32) {
    %c0_i32 = arith.constant 0 : i32
    %c0_i32_0 = arith.constant 0 : i32
    %c0_i32_1 = arith.constant 0 : i32
    return %c0_i32, %c0_i32_0 : i32, i32
  }
  func.func @transform_5(%arg0: i32) -> (i32, i32) {
    %c0_i32 = arith.constant 0 : i32
    %c0_i32_0 = arith.constant 0 : i32
    %c0_i32_1 = arith.constant 0 : i32
    return %c0_i32, %c0_i32_0 : i32, i32
  }
  func.func @transform_6(%arg0: i32) -> (i32, i32) {
    %c0_i32 = arith.constant 0 : i32
    %c0_i32_0 = arith.constant 0 : i32
    %c0_i32_1 = arith.constant 0 : i32
    return %c0_i32, %c0_i32_0 : i32, i32
  }
  func.func @transform_7(%arg0: i32) -> (i32, i32) {
    %c0_i32 = arith.constant 0 : i32
    %c0_i32_0 = arith.constant 0 : i32
    %c0_i32_1 = arith.constant 0 : i32
    return %c0_i32, %c0_i32_0 : i32, i32
  }
  func.func @transform_8(%arg0: i32) -> (i32, i32) {
    %c0_i32 = arith.constant 0 : i32
    %c0_i32_0 = arith.constant 0 : i32
    %c0_i32_1 = arith.constant 0 : i32
    return %c0_i32, %c0_i32_0 : i32, i32
  }
  func.func @transform_9(%arg0: i32) -> (i32, i32) {
    %c0_i32 = arith.constant 0 : i32
    %c0_i32_0 = arith.constant 0 : i32
    %c0_i32_1 = arith.constant 0 : i32
    return %c0_i32, %c0_i32_0 : i32, i32
  }
  func.func @transform_10(%arg0: i32) -> (i32, i32) {
    %c0_i32 = arith.constant 0 : i32
    %c0_i32_0 = arith.constant 0 : i32
    %c0_i32_1 = arith.constant 0 : i32
    return %c0_i32, %c0_i32_0 : i32, i32
  }
  func.func @transform_11(%arg0: i32) -> (i32, i32, i32) {
    %c0_i32 = arith.constant 0 : i32
    %c0_i32_0 = arith.constant 0 : i32
    %c0_i32_1 = arith.constant 0 : i32
    return %arg0, %c0_i32, %c0_i32_0 : i32, i32, i32
  }
}

</mosaic_0001>

<llo_original>
// kernel: rcab_forward.1
$region0: #{rcab_forward.1}
  #allocation0 [shape = 'u32[]', space=smem, size = 0x4, offset = 0x4, fixed_abs, tag = 'smem constant byte address 0x4 - core index']
  #allocation1 [shape = 'u32[72,128]{1,0:T(1,128)}', space=vmem, size = 0x9000, scoped, tag = 'internal scratch']
  #allocation2 [shape = 'f32[768,256]{1,0:T(8,128)}', space=vmem, size = 0xc0000, scoped, tag = 'scratch operand']
  #allocation3 [shape = 's32[1]{0}', space=sflag, size = 0x4, scoped, tag = 'scratch operand']
  #allocation6 [shape = 's32[]', space=sflag, size = 0x4, offset = 0, fixed_abs, tag = 'sflag constant byte address 0x0 - dummy sync flag']
  #allocation7 [shape = 's32[]', space=sflag, size = 0x4, offset = 0, fixed_abs, tag = 'sflag constant byte address 0x0 - dummy sync flag']
  #allocation8 [shape = 'u32[]', space=smem, size = 0x4, offset = 0x44, fixed_abs, tag = 'smem constant byte address 0x44 - assertion arg 0']
  #allocation9 [shape = 'u32[]', space=smem, size = 0x4, offset = 0x48, fixed_abs, tag = 'smem constant byte address 0x48 - assertion arg 1']
  %s0 = inlined_call_operand.vmem [shape: f32[2,20,256], index: 0, kind: input, shape index: {}]
  %s1 = inlined_call_operand.hbm [shape: f32[768,256], index: 1, kind: input, shape index: {}]
  %s2 = inlined_call_operand.vmem [shape: f32[1,256], index: 2, kind: input, shape index: {}]
  %s3 = inlined_call_operand.hbm [shape: f32[768,256], index: 3, kind: input, shape index: {}]
  %s4 = inlined_call_operand.vmem [shape: f32[1,256], index: 4, kind: input, shape index: {}]
  %s5 = inlined_call_operand.vmem [shape: f32[16,4], index: 5, kind: input, shape index: {}]
  %s6 = inlined_call_operand.vmem [shape: f32[1,4], index: 6, kind: input, shape index: {}]
  %s7 = inlined_call_operand.vmem [shape: f32[4,16], index: 7, kind: input, shape index: {}]
  %s8 = inlined_call_operand.vmem [shape: f32[1,16], index: 8, kind: input, shape index: {}]
  %s9 = inlined_call_operand.vmem [shape: f32[256,16], index: 9, kind: input, shape index: {}]
  %s10 = inlined_call_operand.vmem [shape: f32[16,256], index: 10, kind: input, shape index: {}]
  %s11 = inlined_call_operand.vmem [shape: f32[2,16,256], index: 11, kind: output, shape index: {}]
  %s12 = sld [smem:[#allocation0]]
  $region81: #{rcab_forward.1} parent=0
    _
  %s14 = ssub.s32 1, %s12
  %s15 = scalar_select 0, %s14, %s12
  $region1: #{rcab_forward.1} parent=0
    #allocation4 [shape = 'u8[786432]{0}', space=vmem, size = 0xc0000, scoped, tag = 'input window, operand 1, single buffered']
    #allocation5 [shape = 's32[2]{0}', space=sflag, size = 0x8, scoped, tag = 'scoped memory for rcab_forward.1']
    %16 = vsyncpa [#allocation5], 0
    loop: start=0, step=1, limit=4
    $region2: #{rcab_forward.1} parent=1 // loop_pre_header
      _
    $region3: #{rcab_forward.1} parent=1 // loop_header
      %s18 = sphi 0, %s22
      %p19 = scmp.ge.s32.totalorder %s18, 4
      %s28 = sphi 0, %s30
      %s31 = sphi 0, %s28
      %s32 = sphi 0, %s31
      %s48 = sphi 0, %s32
      %s52 = sphi 0, %s52
      %s54 = sphi 0, %s52
      %s55 = sphi 0, %s54
      %s69 = sphi 0, %s55
      %s73 = sphi 0, %s73
      %s75 = sphi 0, %s73
      %s76 = sphi 0, %s75
      %s90 = sphi 0, %s76
      %s94 = sphi 0, %s94
      %s96 = sphi 0, %s94
      %s97 = sphi 0, %s96
      %s111 = sphi 0, %s97
      %s115 = sphi 0, %s115
      %s117 = sphi 0, %s115
      %s118 = sphi 0, %s117
      %s132 = sphi 0, %s118
      %s136 = sphi 0, %s136
      %s138 = sphi 0, %s136
      %s139 = sphi 0, %s138
      %s153 = sphi 0, %s139
      %s157 = sphi 0, %s157
      %s159 = sphi 0, %s157
      %s160 = sphi 0, %s159
      %s174 = sphi 0, %s160
      %s178 = sphi 0, %s178
      %s180 = sphi 0, %s178
      %s181 = sphi 0, %s180
      %s195 = sphi 0, %s181
      %s199 = sphi 0, %s199
      %s201 = sphi 0, %s199
      %s202 = sphi 0, %s201
      %s216 = sphi 0, %s202
      %s220 = sphi 0, %s220
      %s222 = sphi 0, %s220
      %s223 = sphi 0, %s222
      %s237 = sphi 0, %s223
      %s243 = sphi 0, %s245
      %s246 = sphi 0, %s243
      %s247 = sphi 0, %s246
      %s263 = sphi 0, %s247
    $region4: #{rcab_forward.1} parent=1 // loop_header_branch
      %21 = sbr.rel (%p19) target = $region8
    $region5: #{rcab_forward.1} parent=1 // loop_body
      %s23 = ssub.s32 %s18, 1
      %s24 = ssub.s32 %s18, 2
      %s25 = sadd.s32 %s18, 1
      %s26 = ssub.s32 %s18, %s25
      %p27 = scmp.eq.s32.totalorder %s26, 0
      %s29 = sadd.s32 %s28, 1
      %s30 = scalar_select %p27, %s28, %s29
      %p33 = pneg %p27
      %p34 = scmp.eq.s32.totalorder %s18, 1
      %p35 = por %p33, %p34
      %p36 = scmp.ne.s32.totalorder %s28, %s31
      %p37 = scmp.eq.s32.totalorder %s18, 0
      %p38 = por %p36, %p37
      %p39 = scmp.ne.s32.totalorder %s28, %s31
      %p40 = scmp.eq.s32.totalorder %s23, 1
      %p41 = por %p39, %p40
      %p42 = scmp.ne.s32.totalorder %s31, %s32
      %p43 = scmp.eq.s32.totalorder %s23, 0
      %p44 = por %p42, %p43
      %p45 = scmp.ne.s32.totalorder %s31, %s32
      %p46 = scmp.eq.s32.totalorder %s24, 1
      %p47 = por %p45, %p46
      %p49 = scmp.ne.s32.totalorder %s32, %s48
      %p50 = scmp.eq.s32.totalorder %s24, 0
      %p51 = por %p49, %p50
      %s53 = sadd.s32 %s52, 1
      %p56 = scmp.eq.s32.totalorder %s18, 1
      %p57 = scmp.ne.s32.totalorder %s52, %s54
      %p58 = scmp.eq.s32.totalorder %s18, 0
      %p59 = por %p57, %p58
      %p60 = scmp.ne.s32.totalorder %s52, %s54
      %p61 = scmp.eq.s32.totalorder %s23, 1
      %p62 = por %p60, %p61
      %p63 = scmp.ne.s32.totalorder %s54, %s55
      %p64 = scmp.eq.s32.totalorder %s23, 0
      %p65 = por %p63, %p64
      %p66 = scmp.ne.s32.totalorder %s54, %s55
      %p67 = scmp.eq.s32.totalorder %s24, 1
      %p68 = por %p66, %p67
      %p70 = scmp.ne.s32.totalorder %s55, %s69
      %p71 = scmp.eq.s32.totalorder %s24, 0
      %p72 = por %p70, %p71
      %s74 = sadd.s32 %s73, 1
      %p77 = scmp.eq.s32.totalorder %s18, 1
      %p78 = scmp.ne.s32.totalorder %s73, %s75
      %p79 = scmp.eq.s32.totalorder %s18, 0
      %p80 = por %p78, %p79
      %p81 = scmp.ne.s32.totalorder %s73, %s75
      %p82 = scmp.eq.s32.totalorder %s23, 1
      %p83 = por %p81, %p82
      %p84 = scmp.ne.s32.totalorder %s75, %s76
      %p85 = scmp.eq.s32.totalorder %s23, 0
      %p86 = por %p84, %p85
      %p87 = scmp.ne.s32.totalorder %s75, %s76
      %p88 = scmp.eq.s32.totalorder %s24, 1
      %p89 = por %p87, %p88
      %p91 = scmp.ne.s32.totalorder %s76, %s90
      %p92 = scmp.eq.s32.totalorder %s24, 0
      %p93 = por %p91, %p92
      %s95 = sadd.s32 %s94, 1
      %p98 = scmp.eq.s32.totalorder %s18, 1
      %p99 = scmp.ne.s32.totalorder %s94, %s96
      %p100 = scmp.eq.s32.totalorder %s18, 0
      %p101 = por %p99, %p100
      %p102 = scmp.ne.s32.totalorder %s94, %s96
      %p103 = scmp.eq.s32.totalorder %s23, 1
      %p104 = por %p102, %p103
      %p105 = scmp.ne.s32.totalorder %s96, %s97
      %p106 = scmp.eq.s32.totalorder %s23, 0
      %p107 = por %p105, %p106
      %p108 = scmp.ne.s32.totalorder %s96, %s97
      %p109 = scmp.eq.s32.totalorder %s24, 1
      %p110 = por %p108, %p109
      %p112 = scmp.ne.s32.totalorder %s97, %s111
      %p113 = scmp.eq.s32.totalorder %s24, 0
      %p114 = por %p112, %p113
      %s116 = sadd.s32 %s115, 1
      %p119 = scmp.eq.s32.totalorder %s18, 1
      %p120 = scmp.ne.s32.totalorder %s115, %s117
      %p121 = scmp.eq.s32.totalorder %s18, 0
      %p122 = por %p120, %p121
      %p123 = scmp.ne.s32.totalorder %s115, %s117
      %p124 = scmp.eq.s32.totalorder %s23, 1
      %p125 = por %p123, %p124
      %p126 = scmp.ne.s32.totalorder %s117, %s118
      %p127 = scmp.eq.s32.totalorder %s23, 0
      %p128 = por %p126, %p127
      %p129 = scmp.ne.s32.totalorder %s117, %s118
      %p130 = scmp.eq.s32.totalorder %s24, 1
      %p131 = por %p129, %p130
      %p133 = scmp.ne.s32.totalorder %s118, %s132
      %p134 = scmp.eq.s32.totalorder %s24, 0
      %p135 = por %p133, %p134
      %s137 = sadd.s32 %s136, 1
      %p140 = scmp.eq.s32.totalorder %s18, 1
      %p141 = scmp.ne.s32.totalorder %s136, %s138
      %p142 = scmp.eq.s32.totalorder %s18, 0
      %p143 = por %p141, %p142
      %p144 = scmp.ne.s32.totalorder %s136, %s138
      %p145 = scmp.eq.s32.totalorder %s23, 1
      %p146 = por %p144, %p145
      %p147 = scmp.ne.s32.totalorder %s138, %s139
      %p148 = scmp.eq.s32.totalorder %s23, 0
      %p149 = por %p147, %p148
      %p150 = scmp.ne.s32.totalorder %s138, %s139
      %p151 = scmp.eq.s32.totalorder %s24, 1
      %p152 = por %p150, %p151
      %p154 = scmp.ne.s32.totalorder %s139, %s153
      %p155 = scmp.eq.s32.totalorder %s24, 0
      %p156 = por %p154, %p155
      %s158 = sadd.s32 %s157, 1
      %p161 = scmp.eq.s32.totalorder %s18, 1
      %p162 = scmp.ne.s32.totalorder %s157, %s159
      %p163 = scmp.eq.s32.totalorder %s18, 0
      %p164 = por %p162, %p163
      %p165 = scmp.ne.s32.totalorder %s157, %s159
      %p166 = scmp.eq.s32.totalorder %s23, 1
      %p167 = por %p165, %p166
      %p168 = scmp.ne.s32.totalorder %s159, %s160
      %p169 = scmp.eq.s32.totalorder %s23, 0
      %p170 = por %p168, %p169
      %p171 = scmp.ne.s32.totalorder %s159, %s160
      %p172 = scmp.eq.s32.totalorder %s24, 1
      %p173 = por %p171, %p172
      %p175 = scmp.ne.s32.totalorder %s160, %s174
      %p176 = scmp.eq.s32.totalorder %s24, 0
      %p177 = por %p175, %p176
      %s179 = sadd.s32 %s178, 1
      %p182 = scmp.eq.s32.totalorder %s18, 1
      %p183 = scmp.ne.s32.totalorder %s178, %s180
      %p184 = scmp.eq.s32.totalorder %s18, 0
      %p185 = por %p183, %p184
      %p186 = scmp.ne.s32.totalorder %s178, %s180
      %p187 = scmp.eq.s32.totalorder %s23, 1
      %p188 = por %p186, %p187
      %p189 = scmp.ne.s32.totalorder %s180, %s181
      %p190 = scmp.eq.s32.totalorder %s23, 0
      %p191 = por %p189, %p190
      %p192 = scmp.ne.s32.totalorder %s180, %s181
      %p193 = scmp.eq.s32.totalorder %s24, 1
      %p194 = por %p192, %p193
      %p196 = scmp.ne.s32.totalorder %s181, %s195
      %p197 = scmp.eq.s32.totalorder %s24, 0
      %p198 = por %p196, %p197
      %s200 = sadd.s32 %s199, 1
      %p203 = scmp.eq.s32.totalorder %s18, 1
      %p204 = scmp.ne.s32.totalorder %s199, %s201
      %p205 = scmp.eq.s32.totalorder %s18, 0
      %p206 = por %p204, %p205
      %p207 = scmp.ne.s32.totalorder %s199, %s201
      %p208 = scmp.eq.s32.totalorder %s23, 1
      %p209 = por %p207, %p208
      %p210 = scmp.ne.s32.totalorder %s201, %s202
      %p211 = scmp.eq.s32.totalorder %s23, 0
      %p212 = por %p210, %p211
      %p213 = scmp.ne.s32.totalorder %s201, %s202
      %p214 = scmp.eq.s32.totalorder %s24, 1
      %p215 = por %p213, %p214
      %p217 = scmp.ne.s32.totalorder %s202, %s216
      %p218 = scmp.eq.s32.totalorder %s24, 0
      %p219 = por %p217, %p218
      %s221 = sadd.s32 %s220, 1
      %p224 = scmp.eq.s32.totalorder %s18, 1
      %p225 = scmp.ne.s32.totalorder %s220, %s222
      %p226 = scmp.eq.s32.totalorder %s18, 0
      %p227 = por %p225, %p226
      %p228 = scmp.ne.s32.totalorder %s220, %s222
      %p229 = scmp.eq.s32.totalorder %s23, 1
      %p230 = por %p228, %p229
      %p231 = scmp.ne.s32.totalorder %s222, %s223
      %p232 = scmp.eq.s32.totalorder %s23, 0
      %p233 = por %p231, %p232
      %p234 = scmp.ne.s32.totalorder %s222, %s223
      %p235 = scmp.eq.s32.totalorder %s24, 1
      %p236 = por %p234, %p235
      %p238 = scmp.ne.s32.totalorder %s223, %s237
      %p239 = scmp.eq.s32.totalorder %s24, 0
      %p240 = por %p238, %p239
      %s241 = ssub.s32 %s18, %s25
      %p242 = scmp.eq.s32.totalorder %s241, 0
      %s244 = sadd.s32 %s243, 1
      %s245 = scalar_select %p242, %s243, %s244
      %p248 = pneg %p242
      %p249 = scmp.eq.s32.totalorder %s18, 1
      %p250 = por %p248, %p249
      %p251 = scmp.ne.s32.totalorder %s243, %s246
      %p252 = scmp.eq.s32.totalorder %s18, 0
      %p253 = por %p251, %p252
      %p254 = scmp.ne.s32.totalorder %s243, %s246
      %p255 = scmp.eq.s32.totalorder %s23, 1
      %p256 = por %p254, %p255
      %p257 = scmp.ne.s32.totalorder %s246, %s247
      %p258 = scmp.eq.s32.totalorder %s23, 0
      %p259 = por %p257, %p258
      %p260 = scmp.ne.s32.totalorder %s246, %s247
      %p261 = scmp.eq.s32.totalorder %s24, 1
      %p262 = por %p260, %p261
      %p264 = scmp.ne.s32.totalorder %s247, %s263
      %p265 = scmp.eq.s32.totalorder %s24, 0
      %p266 = por %p264, %p265
      %p267 = scmp.le.s32.totalorder 1, %s18
      %p268 = scmp.lt.s32.totalorder %s18, 3
      %p269 = pnand %p267, %p268
      %p270 = pneg %p269
      // Predicated region
      $region9: #{rcab_forward.1} parent=5 // pred_check
        _
      $region10: #{rcab_forward.1} parent=5 // pred_check_branch
        %272 = sbr.rel (%p269) target = $region12
      $region11: #{rcab_forward.1} parent=5 // pred_region
        %s273 = ssub.s32 %s18, 1
        // Predicated region
        $region13: #{rcab_forward.1} parent=11 // pred_check
          %p274 = pneg %p65
        $region14: #{rcab_forward.1} parent=11 // pred_check_branch
          %276 = sbr.rel (%p274) target = $region16
        $region15: #{rcab_forward.1} parent=11 // pred_region
          %278 = vsyncadd [#allocation5], 0
          %s279 = sshll.u32 %s1, 4
          %s280 = int_to_ptr.hbm [resolvable:$true] %s279
          %s281 = sshll.u32 [#allocation4], 4
          %s282 = int_to_ptr.vmem [resolvable:$true] %s281
          %287 = dma.hbm_to_vmem [thread:$0]  %s280, 24576, %s282, [#allocation5], 256, 256, 16
        $region16: #{rcab_forward.1} parent=11 // pred_fallthru
          _
        // Predicated region
        $region17: #{rcab_forward.1} parent=11 // pred_check
          %p288 = pneg %p86
        $region18: #{rcab_forward.1} parent=11 // pred_check_branch
          %290 = sbr.rel (%p288) target = $region20
        $region19: #{rcab_forward.1} parent=11 // pred_region
          _
        $region20: #{rcab_forward.1} parent=11 // pred_fallthru
          _
        // Predicated region
        $region21: #{rcab_forward.1} parent=11 // pred_check
          %p291 = pneg %p107
        $region22: #{rcab_forward.1} parent=11 // pred_check_branch
          %293 = sbr.rel (%p291) target = $region24
        $region23: #{rcab_forward.1} parent=11 // pred_region
          _
        $region24: #{rcab_forward.1} parent=11 // pred_fallthru
          _
        // Predicated region
        $region25: #{rcab_forward.1} parent=11 // pred_check
          %p294 = pneg %p128
        $region26: #{rcab_forward.1} parent=11 // pred_check_branch
          %296 = sbr.rel (%p294) target = $region28
        $region27: #{rcab_forward.1} parent=11 // pred_region
          _
        $region28: #{rcab_forward.1} parent=11 // pred_fallthru
          _
        // Predicated region
        $region29: #{rcab_forward.1} parent=11 // pred_check
          %p297 = pneg %p149
        $region30: #{rcab_forward.1} parent=11 // pred_check_branch
          %299 = sbr.rel (%p297) target = $region32
        $region31: #{rcab_forward.1} parent=11 // pred_region
          _
        $region32: #{rcab_forward.1} parent=11 // pred_fallthru
          _
        // Predicated region
        $region33: #{rcab_forward.1} parent=11 // pred_check
          %p300 = pneg %p170
        $region34: #{rcab_forward.1} parent=11 // pred_check_branch
          %302 = sbr.rel (%p300) target = $region36
        $region35: #{rcab_forward.1} parent=11 // pred_region
          _
        $region36: #{rcab_forward.1} parent=11 // pred_fallthru
          _
        // Predicated region
        $region37: #{rcab_forward.1} parent=11 // pred_check
          %p303 = pneg %p191
        $region38: #{rcab_forward.1} parent=11 // pred_check_branch
          %305 = sbr.rel (%p303) target = $region40
        $region39: #{rcab_forward.1} parent=11 // pred_region
          _
        $region40: #{rcab_forward.1} parent=11 // pred_fallthru
          _
        // Predicated region
        $region41: #{rcab_forward.1} parent=11 // pred_check
          %p306 = pneg %p212
        $region42: #{rcab_forward.1} parent=11 // pred_check_branch
          %308 = sbr.rel (%p306) target = $region44
        $region43: #{rcab_forward.1} parent=11 // pred_region
          _
        $region44: #{rcab_forward.1} parent=11 // pred_fallthru
          _
        // Predicated region
        $region45: #{rcab_forward.1} parent=11 // pred_check
          %p309 = pneg %p233
        $region46: #{rcab_forward.1} parent=11 // pred_check_branch
          %311 = sbr.rel (%p309) target = $region48
        $region47: #{rcab_forward.1} parent=11 // pred_region
          _
        $region48: #{rcab_forward.1} parent=11 // pred_fallthru
          _
      $region12: #{rcab_forward.1} parent=5 // pred_fallthru
        _
      %p312 = scmp.lt.s32.totalorder %s18, 2
      // Predicated region
      $region49: #{rcab_forward.1} parent=5 // pred_check
        %p313 = pneg %p312
      $region50: #{rcab_forward.1} parent=5 // pred_check_branch
        %315 = sbr.rel (%p313) target = $region52
      $region51: #{rcab_forward.1} parent=5 // pred_region
        // Predicated region
        $region53: #{rcab_forward.1} parent=51 // pred_check
          %p316 = pneg %p38
        $region54: #{rcab_forward.1} parent=51 // pred_check_branch
          %318 = sbr.rel (%p316) target = $region56
        $region55: #{rcab_forward.1} parent=51 // pred_region
          %p319 = scmp.lt.s32.totalorder %s18, 1
          %s320 = scalar_select %p319, %s18, 1
          %s321 = smul.addr %s320, 6
          %s322 = smul.addr %s321, 8
          %s323 = scalar_lea.vmem %s0, %s322
        $region56: #{rcab_forward.1} parent=51 // pred_fallthru
          _
      $region52: #{rcab_forward.1} parent=5 // pred_fallthru
        _
      %p324 = scmp.le.s32.totalorder 1, %s18
      %p325 = scmp.lt.s32.totalorder %s18, 3
      %p326 = pnand %p324, %p325
      %p327 = pneg %p326
      // Predicated region
      $region57: #{rcab_forward.1} parent=5 // pred_check
        _
      $region58: #{rcab_forward.1} parent=5 // pred_check_branch
        %329 = sbr.rel (%p326) target = $region60
      $region59: #{rcab_forward.1} parent=5 // pred_region
        %s330 = ssub.s32 %s18, 1
        // Predicated region
        $region61: #{rcab_forward.1} parent=59 // pred_check
          %p331 = pneg %p65
        $region62: #{rcab_forward.1} parent=59 // pred_check_branch
          %333 = sbr.rel (%p331) target = $region64
        $region63: #{rcab_forward.1} parent=59 // pred_region
          %335 = dma.done [#allocation5], 24576
        $region64: #{rcab_forward.1} parent=59 // pred_fallthru
          _
        %p336 = scmp.lt.s32.totalorder %s23, 1
        %s337 = scalar_select %p336, %s23, 1
        %s338 = smul.addr %s337, 6
        %s339 = smul.addr %s338, 8
        %s340 = scalar_lea.vmem %s0, %s339
        %p341 = pneg %p44
        %p342 = pneg %p41
        %p343 = pneg %p65
        %p344 = pneg %p62
        %p345 = pneg %p86
        %p346 = pneg %p83
        %p347 = pneg %p107
        %p348 = pneg %p104
        %p349 = pneg %p128
        %p350 = pneg %p125
        %p351 = pneg %p149
        %p352 = pneg %p146
        %p353 = pneg %p170
        %p354 = pneg %p167
        %p355 = pneg %p191
        %p356 = pneg %p188
        %p357 = pneg %p212
        %p358 = pneg %p209
        %p359 = pneg %p233
        %p360 = pneg %p230
        %p361 = pneg %p259
        %p362 = pneg %p256
        %p363 = scmp.lt.s32.totalorder %s23, 1
        %s364 = scalar_select %p363, %s23, 1
        %s365 = smul.addr %s364, 4
        %s366 = smul.addr %s365, 8
        %s367 = scalar_lea.vmem %s11, %s366
        %p368 = scmp.lt.s32.totalorder %s23, 1
        %s369 = scalar_select %p368, %s23, 1
        %s370 = smul.addr %s369, 6
        %s371 = smul.addr %s370, 8
        %s372 = scalar_lea.vmem %s0, %s371
        %p373 = scmp.lt.s32.totalorder %s23, 1
        %s374 = scalar_select %p373, %s23, 1
        %s375 = smul.addr %s374, 4
        %s376 = smul.addr %s375, 8
        %s377 = scalar_lea.vmem %s11, %s376
        // Predicated region
        $region65: #{rcab_forward.1} parent=59 // pred_check
          _
        $region66: #{rcab_forward.1} parent=59 // pred_check_branch
          %379 = sbr.rel target = $region68
        $region67: #{rcab_forward.1} parent=59 // pred_region
          %380 = sst [smem:[#allocation8]] [#allocation7]
          %381 = sst [smem:[#allocation9]] [#allocation6]
        $region68: #{rcab_forward.1} parent=59 // pred_fallthru
          _
        %383 = shalt.err (0)
        %s385 = sshll.u32 %s3, 4
        %s386 = int_to_ptr.hbm [resolvable:$true] %s385
        %s387 = sshll.u32 [#allocation2], 4
        %s388 = int_to_ptr.vmem [resolvable:$true] %s387
        %390 = dma.hbm_to_vmem [thread:$0]  %s386, 24576, %s388, [#allocation3]
        %v391 = vld [vmem:[%s372] sm:$0xff]
        %v392 = vld [vmem:[%s372 + $0x8] sm:$0xff]
        %v393 = vld [vmem:[%s372 + $0x10] sm:$0xff]
        %v394 = vld [vmem:[%s372 + $0x18] sm:$0xff]
        %v395 = vld [vmem:[%s372 + $0x20] sm:$0xf]
        %v396 = vld [vmem:[%s372 + $0x28] sm:$0xf]
        %v397 = vld [vmem:[%s2] sm:$0x3]
        %v398 = vld [vmem:[#allocation4] sm:$0xff]
        %v399 = vld [vmem:[#allocation4 + $0x8] sm:$0xff]
        %v400 = vld [vmem:[#allocation4 + $0x10] sm:$0xff]
        %v401 = vld [vmem:[#allocation4 + $0x18] sm:$0xff]
        %v402 = vld [vmem:[#allocation4 + $0x20] sm:$0xff]
        %v403 = vld [vmem:[#allocation4 + $0x28] sm:$0xff]
        %v404 = vld [vmem:[#allocation4 + $0x30] sm:$0xff]
        %v405 = vld [vmem:[#allocation4 + $0x38] sm:$0xff]
        %v406 = vld [vmem:[#allocation4 + $0x40] sm:$0xff]
        %v407 = vld [vmem:[#allocation4 + $0x48] sm:$0xff]
        %v408 = vld [vmem:[#allocation4 + $0x50] sm:$0xff]
        %v409 = vld [vmem:[#allocation4 + $0x58] sm:$0xff]
        %v410 = vld [vmem:[#allocation4 + $0x60] sm:$0xff]
        %v411 = vld [vmem:[#allocation4 + $0x68] sm:$0xff]
        %v412 = vld [vmem:[#allocation4 + $0x70] sm:$0xff]
        %v413 = vld [vmem:[#allocation4 + $0x78] sm:$0xff]
        %v414 = vld [vmem:[#allocation4 + $0x80] sm:$0xff]
        %v415 = vld [vmem:[#allocation4 + $0x88] sm:$0xff]
        %v416 = vld [vmem:[#allocation4 + $0x90] sm:$0xff]
        %v417 = vld [vmem:[#allocation4 + $0x98] sm:$0xff]
        %v418 = vld [vmem:[#allocation4 + $0xa0] sm:$0xff]
        %v419 = vld [vmem:[#allocation4 + $0xa8] sm:$0xff]
        %v420 = vld [vmem:[#allocation4 + $0xb0] sm:$0xff]
        %v421 = vld [vmem:[#allocation4 + $0xb8] sm:$0xff]
        %v422 = vld [vmem:[#allocation4 + $0xc0] sm:$0xff]
        %v423 = vld [vmem:[#allocation4 + $0xc8] sm:$0xff]
        %v424 = vld [vmem:[#allocation4 + $0xd0] sm:$0xff]
        %v425 = vld [vmem:[#allocation4 + $0xd8] sm:$0xff]
        %v426 = vld [vmem:[#allocation4 + $0xe0] sm:$0xff]
        %v427 = vld [vmem:[#allocation4 + $0xe8] sm:$0xff]
        %v428 = vld [vmem:[#allocation4 + $0xf0] sm:$0xff]
        %v429 = vld [vmem:[#allocation4 + $0xf8] sm:$0xff]
        %v430 = vld [vmem:[#allocation4 + $0x100] sm:$0xff]
        %v431 = vld [vmem:[#allocation4 + $0x108] sm:$0xff]
        %v432 = vld [vmem:[#allocation4 + $0x110] sm:$0xff]
        %v433 = vld [vmem:[#allocation4 + $0x118] sm:$0xff]
        %v434 = vld [vmem:[#allocation4 + $0x120] sm:$0xff]
        %v435 = vld [vmem:[#allocation4 + $0x128] sm:$0xff]
        %v436 = vld [vmem:[#allocation4 + $0x130] sm:$0xff]
        %v437 = vld [vmem:[#allocation4 + $0x138] sm:$0xff]
        %v438 = vld [vmem:[#allocation4 + $0x140] sm:$0xff]
        %v439 = vld [vmem:[#allocation4 + $0x148] sm:$0xff]
        %v440 = vld [vmem:[#allocation4 + $0x150] sm:$0xff]
        %v441 = vld [vmem:[#allocation4 + $0x158] sm:$0xff]
        %v442 = vld [vmem:[#allocation4 + $0x160] sm:$0xff]
        %v443 = vld [vmem:[#allocation4 + $0x168] sm:$0xff]
        %v444 = vld [vmem:[#allocation4 + $0x170] sm:$0xff]
        %v445 = vld [vmem:[#allocation4 + $0x178] sm:$0xff]
        %v446 = vld [vmem:[#allocation4 + $0x180] sm:$0xff]
        %v447 = vld [vmem:[#allocation4 + $0x188] sm:$0xff]
        %v448 = vld [vmem:[#allocation4 + $0x190] sm:$0xff]
        %v449 = vld [vmem:[#allocation4 + $0x198] sm:$0xff]
        %v450 = vld [vmem:[#allocation4 + $0x1a0] sm:$0xff]
        %v451 = vld [vmem:[#allocation4 + $0x1a8] sm:$0xff]
        %v452 = vld [vmem:[#allocation4 + $0x1b0] sm:$0xff]
        %v453 = vld [vmem:[#allocation4 + $0x1b8] sm:$0xff]
        %v454 = vld [vmem:[#allocation4 + $0x1c0] sm:$0xff]
        %v455 = vld [vmem:[#allocation4 + $0x1c8] sm:$0xff]
        %v456 = vld [vmem:[#allocation4 + $0x1d0] sm:$0xff]
        %v457 = vld [vmem:[#allocation4 + $0x1d8] sm:$0xff]
        %v458 = vld [vmem:[#allocation4 + $0x1e0] sm:$0xff]
        %v459 = vld [vmem:[#allocation4 + $0x1e8] sm:$0xff]
        %v460 = vld [vmem:[#allocation4 + $0x1f0] sm:$0xff]
        %v461 = vld [vmem:[#allocation4 + $0x1f8] sm:$0xff]
        %v462 = vld [vmem:[#allocation4 + $0x200] sm:$0xff]
        %v463 = vld [vmem:[#allocation4 + $0x208] sm:$0xff]
        %v464 = vld [vmem:[#allocation4 + $0x210] sm:$0xff]
        %v465 = vld [vmem:[#allocation4 + $0x218] sm:$0xff]
        %v466 = vld [vmem:[#allocation4 + $0x220] sm:$0xff]
        %v467 = vld [vmem:[#allocation4 + $0x228] sm:$0xff]
        %v468 = vld [vmem:[#allocation4 + $0x230] sm:$0xff]
        %v469 = vld [vmem:[#allocation4 + $0x238] sm:$0xff]
        %v470 = vld [vmem:[#allocation4 + $0x240] sm:$0xff]
        %v471 = vld [vmem:[#allocation4 + $0x248] sm:$0xff]
        %v472 = vld [vmem:[#allocation4 + $0x250] sm:$0xff]
        %v473 = vld [vmem:[#allocation4 + $0x258] sm:$0xff]
        %v474 = vld [vmem:[#allocation4 + $0x260] sm:$0xff]
        %v475 = vld [vmem:[#allocation4 + $0x268] sm:$0xff]
        %v476 = vld [vmem:[#allocation4 + $0x270] sm:$0xff]
        %v477 = vld [vmem:[#allocation4 + $0x278] sm:$0xff]
        %v478 = vld [vmem:[#allocation4 + $0x280] sm:$0xff]
        %v479 = vld [vmem:[#allocation4 + $0x288] sm:$0xff]
        %v480 = vld [vmem:[#allocation4 + $0x290] sm:$0xff]
        %v481 = vld [vmem:[#allocation4 + $0x298] sm:$0xff]
        %v482 = vld [vmem:[#allocation4 + $0x2a0] sm:$0xff]
        %v483 = vld [vmem:[#allocation4 + $0x2a8] sm:$0xff]
        %v484 = vld [vmem:[#allocation4 + $0x2b0] sm:$0xff]
        %v485 = vld [vmem:[#allocation4 + $0x2b8] sm:$0xff]
        %v486 = vld [vmem:[#allocation4 + $0x2c0] sm:$0xff]
        %v487 = vld [vmem:[#allocation4 + $0x2c8] sm:$0xff]
        %v488 = vld [vmem:[#allocation4 + $0x2d0] sm:$0xff]
        %v489 = vld [vmem:[#allocation4 + $0x2d8] sm:$0xff]
        %v490 = vld [vmem:[#allocation4 + $0x2e0] sm:$0xff]
        %v491 = vld [vmem:[#allocation4 + $0x2e8] sm:$0xff]
        %v492 = vld [vmem:[#allocation4 + $0x2f0] sm:$0xff]
        %v493 = vld [vmem:[#allocation4 + $0x2f8] sm:$0xff]
        %v494 = vld [vmem:[#allocation4 + $0x300] sm:$0xff]
        %v495 = vld [vmem:[#allocation4 + $0x308] sm:$0xff]
        %v496 = vld [vmem:[#allocation4 + $0x310] sm:$0xff]
        %v497 = vld [vmem:[#allocation4 + $0x318] sm:$0xff]
        %v498 = vld [vmem:[#allocation4 + $0x320] sm:$0xff]
        %v499 = vld [vmem:[#allocation4 + $0x328] sm:$0xff]
        %v500 = vld [vmem:[#allocation4 + $0x330] sm:$0xff]
        %v501 = vld [vmem:[#allocation4 + $0x338] sm:$0xff]
        %v502 = vld [vmem:[#allocation4 + $0x340] sm:$0xff]
        %v503 = vld [vmem:[#allocation4 + $0x348] sm:$0xff]
        %v504 = vld [vmem:[#allocation4 + $0x350] sm:$0xff]
        %v505 = vld [vmem:[#allocation4 + $0x358] sm:$0xff]
        %v506 = vld [vmem:[#allocation4 + $0x360] sm:$0xff]
        %v507 = vld [vmem:[#allocation4 + $0x368] sm:$0xff]
        %v508 = vld [vmem:[#allocation4 + $0x370] sm:$0xff]
        %v509 = vld [vmem:[#allocation4 + $0x378] sm:$0xff]
        %v510 = vld [vmem:[#allocation4 + $0x380] sm:$0xff]
        %v511 = vld [vmem:[#allocation4 + $0x388] sm:$0xff]
        %v512 = vld [vmem:[#allocation4 + $0x390] sm:$0xff]
        %v513 = vld [vmem:[#allocation4 + $0x398] sm:$0xff]
        %v514 = vld [vmem:[#allocation4 + $0x3a0] sm:$0xff]
        %v515 = vld [vmem:[#allocation4 + $0x3a8] sm:$0xff]
        %v516 = vld [vmem:[#allocation4 + $0x3b0] sm:$0xff]
        %v517 = vld [vmem:[#allocation4 + $0x3b8] sm:$0xff]
        %v518 = vld [vmem:[#allocation4 + $0x3c0] sm:$0xff]
        %v519 = vld [vmem:[#allocation4 + $0x3c8] sm:$0xff]
        %v520 = vld [vmem:[#allocation4 + $0x3d0] sm:$0xff]
        %v521 = vld [vmem:[#allocation4 + $0x3d8] sm:$0xff]
        %v522 = vld [vmem:[#allocation4 + $0x3e0] sm:$0xff]
        %v523 = vld [vmem:[#allocation4 + $0x3e8] sm:$0xff]
        %v524 = vld [vmem:[#allocation4 + $0x3f0] sm:$0xff]
        %v525 = vld [vmem:[#allocation4 + $0x3f8] sm:$0xff]
        %vm532 = vcmask 1046528
        %v533 = vrot.slane %v391, 1
        %v534 = vrot.slane %v393, 1
        %v535 = vsel %vm532, %v533, %v534
        %v536 = vrot.slane %v392, 1
        %v537 = vrot.slane %v394, 1
        %v538 = vsel %vm532, %v536, %v537
        %v539 = vrot.slane %v395, 1
        %v540 = vsel %vm532, %v534, %v539
        %v541 = vrot.slane %v396, 1
        %v542 = vsel %vm532, %v537, %v541
        %549 = vmatpush.msra.mxu0 %v492
        %550 = vmatpush.msra.mxu0 %v490
        %551 = vmatpush.msra.mxu0 %v488
        %552 = vmatpush.msra.mxu0 %v486
        %553 = vmatpush.msra.mxu0 %v484
        %554 = vmatpush.msra.mxu0 %v482
        %555 = vmatpush.msra.mxu0 %v480
        %556 = vmatpush.msra.mxu0 %v478
        %557 = vmatpush.msra.mxu0 %v476
        %558 = vmatpush.msra.mxu0 %v474
        %559 = vmatpush.msra.mxu0 %v472
        %560 = vmatpush.msra.mxu0 %v470
        %561 = vmatpush.msra.mxu0 %v468
        %562 = vmatpush.msra.mxu0 %v466
        %563 = vmatpush.msra.mxu0 %v464
        %564 = vmatpush.msra.mxu0 %v462
        %565 = vmatmul.f32.gmra.mxu0 %v535
        %v566 = vpop.f32.mrf.mxu0
        %v567 = vadd.f32 0.0, %v566
        %568 = vmatmul.f32.gmra.mxu0 %v540
        %v569 = vpop.f32.mrf.mxu0
        %v570 = vadd.f32 0.0, %v569
        %571 = vmatmul.f32.gmra.mxu0 %v539
        %v572 = vpop.f32.mrf.mxu0
        %v573 = vadd.f32 0.0, %v572
        %574 = vdwg.mxu0
        %575 = vmatpush.msra.mxu0 %v524
        %576 = vmatpush.msra.mxu0 %v522
        %577 = vmatpush.msra.mxu0 %v520
        %578 = vmatpush.msra.mxu0 %v518
        %579 = vmatpush.msra.mxu0 %v516
        %580 = vmatpush.msra.mxu0 %v514
        %581 = vmatpush.msra.mxu0 %v512
        %582 = vmatpush.msra.mxu0 %v510
        %583 = vmatpush.msra.mxu0 %v508
        %584 = vmatpush.msra.mxu0 %v506
        %585 = vmatpush.msra.mxu0 %v504
        %586 = vmatpush.msra.mxu0 %v502
        %587 = vmatpush.msra.mxu0 %v500
        %588 = vmatpush.msra.mxu0 %v498
        %589 = vmatpush.msra.mxu0 %v496
        %590 = vmatpush.msra.mxu0 %v494
        %591 = vmatmul.f32.gmra.mxu0 %v538
        %v592 = vpop.f32.mrf.mxu0
        %v593 = vadd.f32 %v567, %v592
        %594 = vmatmul.f32.gmra.mxu0 %v542
        %v595 = vpop.f32.mrf.mxu0
        %v596 = vadd.f32 %v570, %v595
        %597 = vmatmul.f32.gmra.mxu0 %v541
        %v598 = vpop.f32.mrf.mxu0
        %v599 = vadd.f32 %v573, %v598
        %600 = vdwg.mxu0
        %601 = vmatpush.msra.mxu0 %v493
        %602 = vmatpush.msra.mxu0 %v491
        %603 = vmatpush.msra.mxu0 %v489
        %604 = vmatpush.msra.mxu0 %v487
        %605 = vmatpush.msra.mxu0 %v485
        %606 = vmatpush.msra.mxu0 %v483
        %607 = vmatpush.msra.mxu0 %v481
        %608 = vmatpush.msra.mxu0 %v479
        %609 = vmatpush.msra.mxu0 %v477
        %610 = vmatpush.msra.mxu0 %v475
        %611 = vmatpush.msra.mxu0 %v473
        %612 = vmatpush.msra.mxu0 %v471
        %613 = vmatpush.msra.mxu0 %v469
        %614 = vmatpush.msra.mxu0 %v467
        %615 = vmatpush.msra.mxu0 %v465
        %616 = vmatpush.msra.mxu0 %v463
        %617 = vmatmul.f32.gmra.mxu0 %v535
        %v618 = vpop.f32.mrf.mxu0
        %v619 = vadd.f32 0.0, %v618
        %620 = vmatmul.f32.gmra.mxu0 %v540
        %v621 = vpop.f32.mrf.mxu0
        %v622 = vadd.f32 0.0, %v621
        %623 = vmatmul.f32.gmra.mxu0 %v539
        %v624 = vpop.f32.mrf.mxu0
        %v625 = vadd.f32 0.0, %v624
        %626 = vdwg.mxu0
        %627 = vmatpush.msra.mxu0 %v525
        %628 = vmatpush.msra.mxu0 %v523
        %629 = vmatpush.msra.mxu0 %v521
        %630 = vmatpush.msra.mxu0 %v519
        %631 = vmatpush.msra.mxu0 %v517
        %632 = vmatpush.msra.mxu0 %v515
        %633 = vmatpush.msra.mxu0 %v513
        %634 = vmatpush.msra.mxu0 %v511
        %635 = vmatpush.msra.mxu0 %v509
        %636 = vmatpush.msra.mxu0 %v507
        %637 = vmatpush.msra.mxu0 %v505
        %638 = vmatpush.msra.mxu0 %v503
        %639 = vmatpush.msra.mxu0 %v501
        %640 = vmatpush.msra.mxu0 %v499
        %641 = vmatpush.msra.mxu0 %v497
        %642 = vmatpush.msra.mxu0 %v495
        %643 = vmatmul.f32.gmra.mxu0 %v538
        %v644 = vpop.f32.mrf.mxu0
        %v645 = vadd.f32 %v619, %v644
        %646 = vmatmul.f32.gmra.mxu0 %v542
        %v647 = vpop.f32.mrf.mxu0
        %v648 = vadd.f32 %v622, %v647
        %649 = vmatmul.f32.gmra.mxu0 %v541
        %v650 = vpop.f32.mrf.mxu0
        %v651 = vadd.f32 %v625, %v650
        %652 = vdwg.mxu0
        %653 = vmatpush.msra.mxu0 %v428
        %654 = vmatpush.msra.mxu0 %v426
        %655 = vmatpush.msra.mxu0 %v424
        %656 = vmatpush.msra.mxu0 %v422
        %657 = vmatpush.msra.mxu0 %v420
        %658 = vmatpush.msra.mxu0 %v418
        %659 = vmatpush.msra.mxu0 %v416
        %660 = vmatpush.msra.mxu0 %v414
        %661 = vmatpush.msra.mxu0 %v412
        %662 = vmatpush.msra.mxu0 %v410
        %663 = vmatpush.msra.mxu0 %v408
        %664 = vmatpush.msra.mxu0 %v406
        %665 = vmatpush.msra.mxu0 %v404
        %666 = vmatpush.msra.mxu0 %v402
        %667 = vmatpush.msra.mxu0 %v400
        %668 = vmatpush.msra.mxu0 %v398
        %669 = vmatmul.f32.gmra.mxu0 %v391
        %v670 = vpop.f32.mrf.mxu0
        %v671 = vadd.f32 %v593, %v670
        %672 = vmatmul.f32.gmra.mxu0 %v393
        %v673 = vpop.f32.mrf.mxu0
        %v674 = vadd.f32 %v596, %v673
        %675 = vmatmul.f32.gmra.mxu0 %v395
        %v676 = vpop.f32.mrf.mxu0
        %v677 = vadd.f32 %v599, %v676
        %678 = vdwg.mxu0
        %679 = vmatpush.msra.mxu0 %v460
        %680 = vmatpush.msra.mxu0 %v458
        %681 = vmatpush.msra.mxu0 %v456
        %682 = vmatpush.msra.mxu0 %v454
        %683 = vmatpush.msra.mxu0 %v452
        %684 = vmatpush.msra.mxu0 %v450
        %685 = vmatpush.msra.mxu0 %v448
        %686 = vmatpush.msra.mxu0 %v446
        %687 = vmatpush.msra.mxu0 %v444
        %688 = vmatpush.msra.mxu0 %v442
        %689 = vmatpush.msra.mxu0 %v440
        %690 = vmatpush.msra.mxu0 %v438
        %691 = vmatpush.msra.mxu0 %v436
        %692 = vmatpush.msra.mxu0 %v434
        %693 = vmatpush.msra.mxu0 %v432
        %694 = vmatpush.msra.mxu0 %v430
        %695 = vmatmul.f32.gmra.mxu0 %v392
        %v696 = vpop.f32.mrf.mxu0
        %v697 = vadd.f32 %v671, %v696
        %698 = vmatmul.f32.gmra.mxu0 %v394
        %v699 = vpop.f32.mrf.mxu0
        %v700 = vadd.f32 %v674, %v699
        %701 = vmatmul.f32.gmra.mxu0 %v396
        %v702 = vpop.f32.mrf.mxu0
        %v703 = vadd.f32 %v677, %v702
        %704 = vdwg.mxu0
        %705 = vmatpush.msra.mxu0 %v429
        %706 = vmatpush.msra.mxu0 %v427
        %707 = vmatpush.msra.mxu0 %v425
        %708 = vmatpush.msra.mxu0 %v423
        %709 = vmatpush.msra.mxu0 %v421
        %710 = vmatpush.msra.mxu0 %v419
        %711 = vmatpush.msra.mxu0 %v417
        %712 = vmatpush.msra.mxu0 %v415
        %713 = vmatpush.msra.mxu0 %v413
        %714 = vmatpush.msra.mxu0 %v411
        %715 = vmatpush.msra.mxu0 %v409
        %716 = vmatpush.msra.mxu0 %v407
        %717 = vmatpush.msra.mxu0 %v405
        %718 = vmatpush.msra.mxu0 %v403
        %719 = vmatpush.msra.mxu0 %v401
        %720 = vmatpush.msra.mxu0 %v399
        %721 = vmatmul.f32.gmra.mxu0 %v391
        %v722 = vpop.f32.mrf.mxu0
        %v723 = vadd.f32 %v645, %v722
        %724 = vmatmul.f32.gmra.mxu0 %v393
        %v725 = vpop.f32.mrf.mxu0
        %v726 = vadd.f32 %v648, %v725
        %727 = vmatmul.f32.gmra.mxu0 %v395
        %v728 = vpop.f32.mrf.mxu0
        %v729 = vadd.f32 %v651, %v728
        %730 = vdwg.mxu0
        %731 = vmatpush.msra.mxu0 %v461
        %732 = vmatpush.msra.mxu0 %v459
        %733 = vmatpush.msra.mxu0 %v457
        %734 = vmatpush.msra.mxu0 %v455
        %735 = vmatpush.msra.mxu0 %v453
        %736 = vmatpush.msra.mxu0 %v451
        %737 = vmatpush.msra.mxu0 %v449
        %738 = vmatpush.msra.mxu0 %v447
        %739 = vmatpush.msra.mxu0 %v445
        %740 = vmatpush.msra.mxu0 %v443
        %741 = vmatpush.msra.mxu0 %v441
        %742 = vmatpush.msra.mxu0 %v439
        %743 = vmatpush.msra.mxu0 %v437
        %744 = vmatpush.msra.mxu0 %v435
        %745 = vmatpush.msra.mxu0 %v433
        %746 = vmatpush.msra.mxu0 %v431
        %747 = vmatmul.f32.gmra.mxu0 %v392
        %v748 = vpop.f32.mrf.mxu0
        %v749 = vadd.f32 %v723, %v748
        %750 = vmatmul.f32.gmra.mxu0 %v394
        %v751 = vpop.f32.mrf.mxu0
        %v752 = vadd.f32 %v726, %v751
        %753 = vmatmul.f32.gmra.mxu0 %v396
        %v754 = vpop.f32.mrf.mxu0
        %v755 = vadd.f32 %v729, %v754
        %756 = vdwg.mxu0
        %v757 = vld [vmem:[#allocation4 + $0x400] sm:$0xff]
        %v758 = vld [vmem:[#allocation4 + $0x408] sm:$0xff]
        %v759 = vld [vmem:[#allocation4 + $0x410] sm:$0xff]
        %v760 = vld [vmem:[#allocation4 + $0x418] sm:$0xff]
        %v761 = vld [vmem:[#allocation4 + $0x420] sm:$0xff]
        %v762 = vld [vmem:[#allocation4 + $0x428] sm:$0xff]
        %v763 = vld [vmem:[#allocation4 + $0x430] sm:$0xff]
        %v764 = vld [vmem:[#allocation4 + $0x438] sm:$0xff]
        %v765 = vld [vmem:[#allocation4 + $0x440] sm:$0xff]
        %v766 = vld [vmem:[#allocation4 + $0x448] sm:$0xff]
        %v767 = vld [vmem:[#allocation4 + $0x450] sm:$0xff]
        %v768 = vld [vmem:[#allocation4 + $0x458] sm:$0xff]
        %v769 = vld [vmem:[#allocation4 + $0x460] sm:$0xff]
        %v770 = vld [vmem:[#allocation4 + $0x468] sm:$0xff]
        %v771 = vld [vmem:[#allocation4 + $0x470] sm:$0xff]
        %v772 = vld [vmem:[#allocation4 + $0x478] sm:$0xff]
        %v773 = vld [vmem:[#allocation4 + $0x480] sm:$0xff]
        %v774 = vld [vmem:[#allocation4 + $0x488] sm:$0xff]
        %v775 = vld [vmem:[#allocation4 + $0x490] sm:$0xff]
        %v776 = vld [vmem:[#allocation4 + $0x498] sm:$0xff]
        %v777 = vld [vmem:[#allocation4 + $0x4a0] sm:$0xff]
        %v778 = vld [vmem:[#allocation4 + $0x4a8] sm:$0xff]
        %v779 = vld [vmem:[#allocation4 + $0x4b0] sm:$0xff]
        %v780 = vld [vmem:[#allocation4 + $0x4b8] sm:$0xff]
        %v781 = vld [vmem:[#allocation4 + $0x4c0] sm:$0xff]
        %v782 = vld [vmem:[#allocation4 + $0x4c8] sm:$0xff]
        %v783 = vld [vmem:[#allocation4 + $0x4d0] sm:$0xff]
        %v784 = vld [vmem:[#allocation4 + $0x4d8] sm:$0xff]
        %v785 = vld [vmem:[#allocation4 + $0x4e0] sm:$0xff]
        %v786 = vld [vmem:[#allocation4 + $0x4e8] sm:$0xff]
        %v787 = vld [vmem:[#allocation4 + $0x4f0] sm:$0xff]
        %v788 = vld [vmem:[#allocation4 + $0x4f8] sm:$0xff]
        %v789 = vld [vmem:[#allocation4 + $0x500] sm:$0xff]
        %v790 = vld [vmem:[#allocation4 + $0x508] sm:$0xff]
        %v791 = vld [vmem:[#allocation4 + $0x510] sm:$0xff]
        %v792 = vld [vmem:[#allocation4 + $0x518] sm:$0xff]
        %v793 = vld [vmem:[#allocation4 + $0x520] sm:$0xff]
        %v794 = vld [vmem:[#allocation4 + $0x528] sm:$0xff]
        %v795 = vld [vmem:[#allocation4 + $0x530] sm:$0xff]
        %v796 = vld [vmem:[#allocation4 + $0x538] sm:$0xff]
        %v797 = vld [vmem:[#allocation4 + $0x540] sm:$0xff]
        %v798 = vld [vmem:[#allocation4 + $0x548] sm:$0xff]
        %v799 = vld [vmem:[#allocation4 + $0x550] sm:$0xff]
        %v800 = vld [vmem:[#allocation4 + $0x558] sm:$0xff]
        %v801 = vld [vmem:[#allocation4 + $0x560] sm:$0xff]
        %v802 = vld [vmem:[#allocation4 + $0x568] sm:$0xff]
        %v803 = vld [vmem:[#allocation4 + $0x570] sm:$0xff]
        %v804 = vld [vmem:[#allocation4 + $0x578] sm:$0xff]
        %v805 = vld [vmem:[#allocation4 + $0x580] sm:$0xff]
        %v806 = vld [vmem:[#allocation4 + $0x588] sm:$0xff]
        %v807 = vld [vmem:[#allocation4 + $0x590] sm:$0xff]
        %v808 = vld [vmem:[#allocation4 + $0x598] sm:$0xff]
        %v809 = vld [vmem:[#allocation4 + $0x5a0] sm:$0xff]
        %v810 = vld [vmem:[#allocation4 + $0x5a8] sm:$0xff]
        %v811 = vld [vmem:[#allocation4 + $0x5b0] sm:$0xff]
        %v812 = vld [vmem:[#allocation4 + $0x5b8] sm:$0xff]
        %v813 = vld [vmem:[#allocation4 + $0x5c0] sm:$0xff]
        %v814 = vld [vmem:[#allocation4 + $0x5c8] sm:$0xff]
        %v815 = vld [vmem:[#allocation4 + $0x5d0] sm:$0xff]
        %v816 = vld [vmem:[#allocation4 + $0x5d8] sm:$0xff]
        %v817 = vld [vmem:[#allocation4 + $0x5e0] sm:$0xff]
        %v818 = vld [vmem:[#allocation4 + $0x5e8] sm:$0xff]
        %v819 = vld [vmem:[#allocation4 + $0x5f0] sm:$0xff]
        %v820 = vld [vmem:[#allocation4 + $0x5f8] sm:$0xff]
        %vm821 = vcmask 1045504
        %v822 = vrot.slane %v391, 2
        %v823 = vrot.slane %v393, 2
        %v824 = vsel %vm821, %v822, %v823
        %v825 = vrot.slane %v392, 2
        %v826 = vrot.slane %v394, 2
        %v827 = vsel %vm821, %v825, %v826
        %v828 = vrot.slane %v395, 2
        %v829 = vsel %vm821, %v823, %v828
        %v830 = vrot.slane %v396, 2
        %v831 = vsel %vm821, %v826, %v830
        %838 = vmatpush.msra.mxu0 %v787
        %839 = vmatpush.msra.mxu0 %v785
        %840 = vmatpush.msra.mxu0 %v783
        %841 = vmatpush.msra.mxu0 %v781
        %842 = vmatpush.msra.mxu0 %v779
        %843 = vmatpush.msra.mxu0 %v777
        %844 = vmatpush.msra.mxu0 %v775
        %845 = vmatpush.msra.mxu0 %v773
        %846 = vmatpush.msra.mxu0 %v771
        %847 = vmatpush.msra.mxu0 %v769
        %848 = vmatpush.msra.mxu0 %v767
        %849 = vmatpush.msra.mxu0 %v765
        %850 = vmatpush.msra.mxu0 %v763
        %851 = vmatpush.msra.mxu0 %v761
        %852 = vmatpush.msra.mxu0 %v759
        %853 = vmatpush.msra.mxu0 %v757
        %854 = vmatmul.f32.gmra.mxu0 %v824
        %v855 = vpop.f32.mrf.mxu0
        %v856 = vadd.f32 0.0, %v855
        %857 = vmatmul.f32.gmra.mxu0 %v829
        %v858 = vpop.f32.mrf.mxu0
        %v859 = vadd.f32 0.0, %v858
        %860 = vmatmul.f32.gmra.mxu0 %v828
        %v861 = vpop.f32.mrf.mxu0
        %v862 = vadd.f32 0.0, %v861
        %863 = vdwg.mxu0
        %864 = vmatpush.msra.mxu0 %v819
        %865 = vmatpush.msra.mxu0 %v817
        %866 = vmatpush.msra.mxu0 %v815
        %867 = vmatpush.msra.mxu0 %v813
        %868 = vmatpush.msra.mxu0 %v811
        %869 = vmatpush.msra.mxu0 %v809
        %870 = vmatpush.msra.mxu0 %v807
        %871 = vmatpush.msra.mxu0 %v805
        %872 = vmatpush.msra.mxu0 %v803
        %873 = vmatpush.msra.mxu0 %v801
        %874 = vmatpush.msra.mxu0 %v799
        %875 = vmatpush.msra.mxu0 %v797
        %876 = vmatpush.msra.mxu0 %v795
        %877 = vmatpush.msra.mxu0 %v793
        %878 = vmatpush.msra.mxu0 %v791
        %879 = vmatpush.msra.mxu0 %v789
        %880 = vmatmul.f32.gmra.mxu0 %v827
        %v881 = vpop.f32.mrf.mxu0
        %v882 = vadd.f32 %v856, %v881
        %883 = vmatmul.f32.gmra.mxu0 %v831
        %v884 = vpop.f32.mrf.mxu0
        %v885 = vadd.f32 %v859, %v884
        %886 = vmatmul.f32.gmra.mxu0 %v830
        %v887 = vpop.f32.mrf.mxu0
        %v888 = vadd.f32 %v862, %v887
        %889 = vdwg.mxu0
        %890 = vmatpush.msra.mxu0 %v788
        %891 = vmatpush.msra.mxu0 %v786
        %892 = vmatpush.msra.mxu0 %v784
        %893 = vmatpush.msra.mxu0 %v782
        %894 = vmatpush.msra.mxu0 %v780
        %895 = vmatpush.msra.mxu0 %v778
        %896 = vmatpush.msra.mxu0 %v776
        %897 = vmatpush.msra.mxu0 %v774
        %898 = vmatpush.msra.mxu0 %v772
        %899 = vmatpush.msra.mxu0 %v770
        %900 = vmatpush.msra.mxu0 %v768
        %901 = vmatpush.msra.mxu0 %v766
        %902 = vmatpush.msra.mxu0 %v764
        %903 = vmatpush.msra.mxu0 %v762
        %904 = vmatpush.msra.mxu0 %v760
        %905 = vmatpush.msra.mxu0 %v758
        %906 = vmatmul.f32.gmra.mxu0 %v824
        %v907 = vpop.f32.mrf.mxu0
        %v908 = vadd.f32 0.0, %v907
        %909 = vmatmul.f32.gmra.mxu0 %v829
        %v910 = vpop.f32.mrf.mxu0
        %v911 = vadd.f32 0.0, %v910
        %912 = vmatmul.f32.gmra.mxu0 %v828
        %v913 = vpop.f32.mrf.mxu0
        %v914 = vadd.f32 0.0, %v913
        %915 = vdwg.mxu0
        %916 = vmatpush.msra.mxu0 %v820
        %917 = vmatpush.msra.mxu0 %v818
        %918 = vmatpush.msra.mxu0 %v816
        %919 = vmatpush.msra.mxu0 %v814
        %920 = vmatpush.msra.mxu0 %v812
        %921 = vmatpush.msra.mxu0 %v810
        %922 = vmatpush.msra.mxu0 %v808
        %923 = vmatpush.msra.mxu0 %v806
        %924 = vmatpush.msra.mxu0 %v804
        %925 = vmatpush.msra.mxu0 %v802
        %926 = vmatpush.msra.mxu0 %v800
        %927 = vmatpush.msra.mxu0 %v798
        %928 = vmatpush.msra.mxu0 %v796
        %929 = vmatpush.msra.mxu0 %v794
        %930 = vmatpush.msra.mxu0 %v792
        %931 = vmatpush.msra.mxu0 %v790
        %932 = vmatmul.f32.gmra.mxu0 %v827
        %v933 = vpop.f32.mrf.mxu0
        %v934 = vadd.f32 %v908, %v933
        %935 = vmatmul.f32.gmra.mxu0 %v831
        %v936 = vpop.f32.mrf.mxu0
        %v937 = vadd.f32 %v911, %v936
        %938 = vmatmul.f32.gmra.mxu0 %v830
        %v939 = vpop.f32.mrf.mxu0
        %v940 = vadd.f32 %v914, %v939
        %941 = vdwg.mxu0
        %v942 = vadd.f32 %v697, %v882
        %v943 = vadd.f32 %v749, %v934
        %v944 = vadd.f32 %v700, %v885
        %v945 = vadd.f32 %v752, %v937
        %v946 = vadd.f32 %v703, %v888
        %v947 = vadd.f32 %v755, %v940
        %v949 = vperm.slane %v397, 0
        %v950 = vperm.slane %v397, 1
        %v953 = vadd.f32 %v942, %v949
        %v954 = vadd.f32 %v943, %v950
        %v955 = vadd.f32 %v944, %v949
        %v956 = vadd.f32 %v945, %v950
        %v957 = vadd.f32 %v946, %v949
        %v958 = vadd.f32 %v947, %v950
        %v959 = vmax.f32 %v953, 0.0
        %v960 = vmax.f32 %v954, 0.0
        %v961 = vmax.f32 %v955, 0.0
        %v962 = vmax.f32 %v956, 0.0
        %v963 = vmax.f32 %v957, 0.0
        %v964 = vmax.f32 %v958, 0.0
        %v965 = vlaneseq
        %v966 = vshrl.u32 %v965, 7
        %v967 = vadd.s32 %v966, 8
        %v968 = vadd.s32 %v966, 16
        %vm969 = vcmp.ge.s32.totalorder %v966, 1
        %vm970 = vcmp.ge.s32.totalorder %v967, 1
        %vm971 = vcmp.ge.s32.totalorder %v968, 1
        %vm972 = vcmp.le.s32.totalorder %v966, 16
        %vm973 = vcmp.le.s32.totalorder %v967, 16
        %vm974 = vcmp.le.s32.totalorder %v968, 16
        %vm975 = vmand %vm969, %vm972
        %vm976 = vmand %vm970, %vm973
        %vm977 = vmand %vm971, %vm974
        %v978 = vsel %vm975, 1, 0
        %v979 = vsel %vm976, 1, 0
        %v980 = vsel %vm977, 1, 0
        %vm981 = vcmp.eq.s32.totalorder %v978, 1
        %vm982 = vcmp.eq.s32.totalorder %v979, 1
        %vm983 = vcmp.eq.s32.totalorder %v980, 1
        %v984 = vsel %vm981, %v959, 0.0
        %v985 = vsel %vm981, %v960, 0.0
        %v986 = vsel %vm982, %v961, 0.0
        %v987 = vsel %vm982, %v962, 0.0
        %v988 = vsel %vm983, %v963, 0.0
        %v989 = vsel %vm983, %v964, 0.0
        %s990 = smul.u32 8, 96
        %s991 = smul.u32 %s990, 2
        %s992 = sshll.u32 %s991, 4
        %993 = dma.done [#allocation3], %s992
        %v994 = vld [vmem:[%s4] sm:$0x3]
        %v995 = vld [vmem:[#allocation2] sm:$0xff]
        %v996 = vld [vmem:[#allocation2 + $0x8] sm:$0xff]
        %v997 = vld [vmem:[#allocation2 + $0x10] sm:$0xff]
        %v998 = vld [vmem:[#allocation2 + $0x18] sm:$0xff]
        %v999 = vld [vmem:[#allocation2 + $0x20] sm:$0xff]
        %v1000 = vld [vmem:[#allocation2 + $0x28] sm:$0xff]
        %v1001 = vld [vmem:[#allocation2 + $0x30] sm:$0xff]
        %v1002 = vld [vmem:[#allocation2 + $0x38] sm:$0xff]
        %v1003 = vld [vmem:[#allocation2 + $0x40] sm:$0xff]
        %v1004 = vld [vmem:[#allocation2 + $0x48] sm:$0xff]
        %v1005 = vld [vmem:[#allocation2 + $0x50] sm:$0xff]
        %v1006 = vld [vmem:[#allocation2 + $0x58] sm:$0xff]
        %v1007 = vld [vmem:[#allocation2 + $0x60] sm:$0xff]
        %v1008 = vld [vmem:[#allocation2 + $0x68] sm:$0xff]
        %v1009 = vld [vmem:[#allocation2 + $0x70] sm:$0xff]
        %v1010 = vld [vmem:[#allocation2 + $0x78] sm:$0xff]
        %v1011 = vld [vmem:[#allocation2 + $0x80] sm:$0xff]
        %v1012 = vld [vmem:[#allocation2 + $0x88] sm:$0xff]
        %v1013 = vld [vmem:[#allocation2 + $0x90] sm:$0xff]
        %v1014 = vld [vmem:[#allocation2 + $0x98] sm:$0xff]
        %v1015 = vld [vmem:[#allocation2 + $0xa0] sm:$0xff]
        %v1016 = vld [vmem:[#allocation2 + $0xa8] sm:$0xff]
        %v1017 = vld [vmem:[#allocation2 + $0xb0] sm:$0xff]
        %v1018 = vld [vmem:[#allocation2 + $0xb8] sm:$0xff]
        %v1019 = vld [vmem:[#allocation2 + $0xc0] sm:$0xff]
        %v1020 = vld [vmem:[#allocation2 + $0xc8] sm:$0xff]
        %v1021 = vld [vmem:[#allocation2 + $0xd0] sm:$0xff]
        %v1022 = vld [vmem:[#allocation2 + $0xd8] sm:$0xff]
        %v1023 = vld [vmem:[#allocation2 + $0xe0] sm:$0xff]
        %v1024 = vld [vmem:[#allocation2 + $0xe8] sm:$0xff]
        %v1025 = vld [vmem:[#allocation2 + $0xf0] sm:$0xff]
        %v1026 = vld [vmem:[#allocation2 + $0xf8] sm:$0xff]
        %v1027 = vld [vmem:[#allocation2 + $0x100] sm:$0xff]
        %v1028 = vld [vmem:[#allocation2 + $0x108] sm:$0xff]
        %v1029 = vld [vmem:[#allocation2 + $0x110] sm:$0xff]
        %v1030 = vld [vmem:[#allocation2 + $0x118] sm:$0xff]
        %v1031 = vld [vmem:[#allocation2 + $0x120] sm:$0xff]
        %v1032 = vld [vmem:[#allocation2 + $0x128] sm:$0xff]
        %v1033 = vld [vmem:[#allocation2 + $0x130] sm:$0xff]
        %v1034 = vld [vmem:[#allocation2 + $0x138] sm:$0xff]
        %v1035 = vld [vmem:[#allocation2 + $0x140] sm:$0xff]
        %v1036 = vld [vmem:[#allocation2 + $0x148] sm:$0xff]
        %v1037 = vld [vmem:[#allocation2 + $0x150] sm:$0xff]
        %v1038 = vld [vmem:[#allocation2 + $0x158] sm:$0xff]
        %v1039 = vld [vmem:[#allocation2 + $0x160] sm:$0xff]
        %v1040 = vld [vmem:[#allocation2 + $0x168] sm:$0xff]
        %v1041 = vld [vmem:[#allocation2 + $0x170] sm:$0xff]
        %v1042 = vld [vmem:[#allocation2 + $0x178] sm:$0xff]
        %v1043 = vld [vmem:[#allocation2 + $0x180] sm:$0xff]
        %v1044 = vld [vmem:[#allocation2 + $0x188] sm:$0xff]
        %v1045 = vld [vmem:[#allocation2 + $0x190] sm:$0xff]
        %v1046 = vld [vmem:[#allocation2 + $0x198] sm:$0xff]
        %v1047 = vld [vmem:[#allocation2 + $0x1a0] sm:$0xff]
        %v1048 = vld [vmem:[#allocation2 + $0x1a8] sm:$0xff]
        %v1049 = vld [vmem:[#allocation2 + $0x1b0] sm:$0xff]
        %v1050 = vld [vmem:[#allocation2 + $0x1b8] sm:$0xff]
        %v1051 = vld [vmem:[#allocation2 + $0x1c0] sm:$0xff]
        %v1052 = vld [vmem:[#allocation2 + $0x1c8] sm:$0xff]
        %v1053 = vld [vmem:[#allocation2 + $0x1d0] sm:$0xff]
        %v1054 = vld [vmem:[#allocation2 + $0x1d8] sm:$0xff]
        %v1055 = vld [vmem:[#allocation2 + $0x1e0] sm:$0xff]
        %v1056 = vld [vmem:[#allocation2 + $0x1e8] sm:$0xff]
        %v1057 = vld [vmem:[#allocation2 + $0x1f0] sm:$0xff]
        %v1058 = vld [vmem:[#allocation2 + $0x1f8] sm:$0xff]
        %v1059 = vld [vmem:[#allocation2 + $0x200] sm:$0xff]
        %v1060 = vld [vmem:[#allocation2 + $0x208] sm:$0xff]
        %v1061 = vld [vmem:[#allocation2 + $0x210] sm:$0xff]
        %v1062 = vld [vmem:[#allocation2 + $0x218] sm:$0xff]
        %v1063 = vld [vmem:[#allocation2 + $0x220] sm:$0xff]
        %v1064 = vld [vmem:[#allocation2 + $0x228] sm:$0xff]
        %v1065 = vld [vmem:[#allocation2 + $0x230] sm:$0xff]
        %v1066 = vld [vmem:[#allocation2 + $0x238] sm:$0xff]
        %v1067 = vld [vmem:[#allocation2 + $0x240] sm:$0xff]
        %v1068 = vld [vmem:[#allocation2 + $0x248] sm:$0xff]
        %v1069 = vld [vmem:[#allocation2 + $0x250] sm:$0xff]
        %v1070 = vld [vmem:[#allocation2 + $0x258] sm:$0xff]
        %v1071 = vld [vmem:[#allocation2 + $0x260] sm:$0xff]
        %v1072 = vld [vmem:[#allocation2 + $0x268] sm:$0xff]
        %v1073 = vld [vmem:[#allocation2 + $0x270] sm:$0xff]
        %v1074 = vld [vmem:[#allocation2 + $0x278] sm:$0xff]
        %v1075 = vld [vmem:[#allocation2 + $0x280] sm:$0xff]
        %v1076 = vld [vmem:[#allocation2 + $0x288] sm:$0xff]
        %v1077 = vld [vmem:[#allocation2 + $0x290] sm:$0xff]
        %v1078 = vld [vmem:[#allocation2 + $0x298] sm:$0xff]
        %v1079 = vld [vmem:[#allocation2 + $0x2a0] sm:$0xff]
        %v1080 = vld [vmem:[#allocation2 + $0x2a8] sm:$0xff]
        %v1081 = vld [vmem:[#allocation2 + $0x2b0] sm:$0xff]
        %v1082 = vld [vmem:[#allocation2 + $0x2b8] sm:$0xff]
        %v1083 = vld [vmem:[#allocation2 + $0x2c0] sm:$0xff]
        %v1084 = vld [vmem:[#allocation2 + $0x2c8] sm:$0xff]
        %v1085 = vld [vmem:[#allocation2 + $0x2d0] sm:$0xff]
        %v1086 = vld [vmem:[#allocation2 + $0x2d8] sm:$0xff]
        %v1087 = vld [vmem:[#allocation2 + $0x2e0] sm:$0xff]
        %v1088 = vld [vmem:[#allocation2 + $0x2e8] sm:$0xff]
        %v1089 = vld [vmem:[#allocation2 + $0x2f0] sm:$0xff]
        %v1090 = vld [vmem:[#allocation2 + $0x2f8] sm:$0xff]
        %v1091 = vld [vmem:[#allocation2 + $0x300] sm:$0xff]
        %v1092 = vld [vmem:[#allocation2 + $0x308] sm:$0xff]
        %v1093 = vld [vmem:[#allocation2 + $0x310] sm:$0xff]
        %v1094 = vld [vmem:[#allocation2 + $0x318] sm:$0xff]
        %v1095 = vld [vmem:[#allocation2 + $0x320] sm:$0xff]
        %v1096 = vld [vmem:[#allocation2 + $0x328] sm:$0xff]
        %v1097 = vld [vmem:[#allocation2 + $0x330] sm:$0xff]
        %v1098 = vld [vmem:[#allocation2 + $0x338] sm:$0xff]
        %v1099 = vld [vmem:[#allocation2 + $0x340] sm:$0xff]
        %v1100 = vld [vmem:[#allocation2 + $0x348] sm:$0xff]
        %v1101 = vld [vmem:[#allocation2 + $0x350] sm:$0xff]
        %v1102 = vld [vmem:[#allocation2 + $0x358] sm:$0xff]
        %v1103 = vld [vmem:[#allocation2 + $0x360] sm:$0xff]
        %v1104 = vld [vmem:[#allocation2 + $0x368] sm:$0xff]
        %v1105 = vld [vmem:[#allocation2 + $0x370] sm:$0xff]
        %v1106 = vld [vmem:[#allocation2 + $0x378] sm:$0xff]
        %v1107 = vld [vmem:[#allocation2 + $0x380] sm:$0xff]
        %v1108 = vld [vmem:[#allocation2 + $0x388] sm:$0xff]
        %v1109 = vld [vmem:[#allocation2 + $0x390] sm:$0xff]
        %v1110 = vld [vmem:[#allocation2 + $0x398] sm:$0xff]
        %v1111 = vld [vmem:[#allocation2 + $0x3a0] sm:$0xff]
        %v1112 = vld [vmem:[#allocation2 + $0x3a8] sm:$0xff]
        %v1113 = vld [vmem:[#allocation2 + $0x3b0] sm:$0xff]
        %v1114 = vld [vmem:[#allocation2 + $0x3b8] sm:$0xff]
        %v1115 = vld [vmem:[#allocation2 + $0x3c0] sm:$0xff]
        %v1116 = vld [vmem:[#allocation2 + $0x3c8] sm:$0xff]
        %v1117 = vld [vmem:[#allocation2 + $0x3d0] sm:$0xff]
        %v1118 = vld [vmem:[#allocation2 + $0x3d8] sm:$0xff]
        %v1119 = vld [vmem:[#allocation2 + $0x3e0] sm:$0xff]
        %v1120 = vld [vmem:[#allocation2 + $0x3e8] sm:$0xff]
        %v1121 = vld [vmem:[#allocation2 + $0x3f0] sm:$0xff]
        %v1122 = vld [vmem:[#allocation2 + $0x3f8] sm:$0xff]
        %v1129 = vrot.slane %v984, 1
        %v1130 = vrot.slane %v986, 1
        %v1131 = vsel %vm532, %v1129, %v1130
        %v1132 = vrot.slane %v985, 1
        %v1133 = vrot.slane %v987, 1
        %v1134 = vsel %vm532, %v1132, %v1133
        %v1135 = vrot.slane %v988, 1
        %v1136 = vsel %vm532, %v1130, %v1135
        %v1137 = vrot.slane %v989, 1
        %v1138 = vsel %vm532, %v1133, %v1137
        %1143 = vmatpush.msra.mxu0 %v1089
        %1144 = vmatpush.msra.mxu0 %v1087
        %1145 = vmatpush.msra.mxu0 %v1085
        %1146 = vmatpush.msra.mxu0 %v1083
        %1147 = vmatpush.msra.mxu0 %v1081
        %1148 = vmatpush.msra.mxu0 %v1079
        %1149 = vmatpush.msra.mxu0 %v1077
        %1150 = vmatpush.msra.mxu0 %v1075
        %1151 = vmatpush.msra.mxu0 %v1073
        %1152 = vmatpush.msra.mxu0 %v1071
        %1153 = vmatpush.msra.mxu0 %v1069
        %1154 = vmatpush.msra.mxu0 %v1067
        %1155 = vmatpush.msra.mxu0 %v1065
        %1156 = vmatpush.msra.mxu0 %v1063
        %1157 = vmatpush.msra.mxu0 %v1061
        %1158 = vmatpush.msra.mxu0 %v1059
        %1159 = vmatmul.f32.gmra.mxu0 %v1131
        %v1160 = vpop.f32.mrf.mxu0
        %v1161 = vadd.f32 0.0, %v1160
        %1162 = vmatmul.f32.gmra.mxu0 %v1136
        %v1163 = vpop.f32.mrf.mxu0
        %v1164 = vadd.f32 0.0, %v1163
        %1165 = vdwg.mxu0
        %1166 = vmatpush.msra.mxu0 %v1121
        %1167 = vmatpush.msra.mxu0 %v1119
        %1168 = vmatpush.msra.mxu0 %v1117
        %1169 = vmatpush.msra.mxu0 %v1115
        %1170 = vmatpush.msra.mxu0 %v1113
        %1171 = vmatpush.msra.mxu0 %v1111
        %1172 = vmatpush.msra.mxu0 %v1109
        %1173 = vmatpush.msra.mxu0 %v1107
        %1174 = vmatpush.msra.mxu0 %v1105
        %1175 = vmatpush.msra.mxu0 %v1103
        %1176 = vmatpush.msra.mxu0 %v1101
        %1177 = vmatpush.msra.mxu0 %v1099
        %1178 = vmatpush.msra.mxu0 %v1097
        %1179 = vmatpush.msra.mxu0 %v1095
        %1180 = vmatpush.msra.mxu0 %v1093
        %1181 = vmatpush.msra.mxu0 %v1091
        %1182 = vmatmul.f32.gmra.mxu0 %v1134
        %v1183 = vpop.f32.mrf.mxu0
        %v1184 = vadd.f32 %v1161, %v1183
        %1185 = vmatmul.f32.gmra.mxu0 %v1138
        %v1186 = vpop.f32.mrf.mxu0
        %v1187 = vadd.f32 %v1164, %v1186
        %1188 = vdwg.mxu0
        %1189 = vmatpush.msra.mxu0 %v1090
        %1190 = vmatpush.msra.mxu0 %v1088
        %1191 = vmatpush.msra.mxu0 %v1086
        %1192 = vmatpush.msra.mxu0 %v1084
        %1193 = vmatpush.msra.mxu0 %v1082
        %1194 = vmatpush.msra.mxu0 %v1080
        %1195 = vmatpush.msra.mxu0 %v1078
        %1196 = vmatpush.msra.mxu0 %v1076
        %1197 = vmatpush.msra.mxu0 %v1074
        %1198 = vmatpush.msra.mxu0 %v1072
        %1199 = vmatpush.msra.mxu0 %v1070
        %1200 = vmatpush.msra.mxu0 %v1068
        %1201 = vmatpush.msra.mxu0 %v1066
        %1202 = vmatpush.msra.mxu0 %v1064
        %1203 = vmatpush.msra.mxu0 %v1062
        %1204 = vmatpush.msra.mxu0 %v1060
        %1205 = vmatmul.f32.gmra.mxu0 %v1131
        %v1206 = vpop.f32.mrf.mxu0
        %v1207 = vadd.f32 0.0, %v1206
        %1208 = vmatmul.f32.gmra.mxu0 %v1136
        %v1209 = vpop.f32.mrf.mxu0
        %v1210 = vadd.f32 0.0, %v1209
        %1211 = vdwg.mxu0
        %1212 = vmatpush.msra.mxu0 %v1122
        %1213 = vmatpush.msra.mxu0 %v1120
        %1214 = vmatpush.msra.mxu0 %v1118
        %1215 = vmatpush.msra.mxu0 %v1116
        %1216 = vmatpush.msra.mxu0 %v1114
        %1217 = vmatpush.msra.mxu0 %v1112
        %1218 = vmatpush.msra.mxu0 %v1110
        %1219 = vmatpush.msra.mxu0 %v1108
        %1220 = vmatpush.msra.mxu0 %v1106
        %1221 = vmatpush.msra.mxu0 %v1104
        %1222 = vmatpush.msra.mxu0 %v1102
        %1223 = vmatpush.msra.mxu0 %v1100
        %1224 = vmatpush.msra.mxu0 %v1098
        %1225 = vmatpush.msra.mxu0 %v1096
        %1226 = vmatpush.msra.mxu0 %v1094
        %1227 = vmatpush.msra.mxu0 %v1092
        %1228 = vmatmul.f32.gmra.mxu0 %v1134
        %v1229 = vpop.f32.mrf.mxu0
        %v1230 = vadd.f32 %v1207, %v1229
        %1231 = vmatmul.f32.gmra.mxu0 %v1138
        %v1232 = vpop.f32.mrf.mxu0
        %v1233 = vadd.f32 %v1210, %v1232
        %1234 = vdwg.mxu0
        %1235 = vmatpush.msra.mxu0 %v1025
        %1236 = vmatpush.msra.mxu0 %v1023
        %1237 = vmatpush.msra.mxu0 %v1021
        %1238 = vmatpush.msra.mxu0 %v1019
        %1239 = vmatpush.msra.mxu0 %v1017
        %1240 = vmatpush.msra.mxu0 %v1015
        %1241 = vmatpush.msra.mxu0 %v1013
        %1242 = vmatpush.msra.mxu0 %v1011
        %1243 = vmatpush.msra.mxu0 %v1009
        %1244 = vmatpush.msra.mxu0 %v1007
        %1245 = vmatpush.msra.mxu0 %v1005
        %1246 = vmatpush.msra.mxu0 %v1003
        %1247 = vmatpush.msra.mxu0 %v1001
        %1248 = vmatpush.msra.mxu0 %v999
        %1249 = vmatpush.msra.mxu0 %v997
        %1250 = vmatpush.msra.mxu0 %v995
        %1251 = vmatmul.f32.gmra.mxu0 %v984
        %v1252 = vpop.f32.mrf.mxu0
        %v1253 = vadd.f32 %v1184, %v1252
        %1254 = vmatmul.f32.gmra.mxu0 %v986
        %v1255 = vpop.f32.mrf.mxu0
        %v1256 = vadd.f32 %v1187, %v1255
        %1257 = vdwg.mxu0
        %1258 = vmatpush.msra.mxu0 %v1057
        %1259 = vmatpush.msra.mxu0 %v1055
        %1260 = vmatpush.msra.mxu0 %v1053
        %1261 = vmatpush.msra.mxu0 %v1051
        %1262 = vmatpush.msra.mxu0 %v1049
        %1263 = vmatpush.msra.mxu0 %v1047
        %1264 = vmatpush.msra.mxu0 %v1045
        %1265 = vmatpush.msra.mxu0 %v1043
        %1266 = vmatpush.msra.mxu0 %v1041
        %1267 = vmatpush.msra.mxu0 %v1039
        %1268 = vmatpush.msra.mxu0 %v1037
        %1269 = vmatpush.msra.mxu0 %v1035
        %1270 = vmatpush.msra.mxu0 %v1033
        %1271 = vmatpush.msra.mxu0 %v1031
        %1272 = vmatpush.msra.mxu0 %v1029
        %1273 = vmatpush.msra.mxu0 %v1027
        %1274 = vmatmul.f32.gmra.mxu0 %v985
        %v1275 = vpop.f32.mrf.mxu0
        %v1276 = vadd.f32 %v1253, %v1275
        %1277 = vmatmul.f32.gmra.mxu0 %v987
        %v1278 = vpop.f32.mrf.mxu0
        %v1279 = vadd.f32 %v1256, %v1278
        %1280 = vdwg.mxu0
        %1281 = vmatpush.msra.mxu0 %v1026
        %1282 = vmatpush.msra.mxu0 %v1024
        %1283 = vmatpush.msra.mxu0 %v1022
        %1284 = vmatpush.msra.mxu0 %v1020
        %1285 = vmatpush.msra.mxu0 %v1018
        %1286 = vmatpush.msra.mxu0 %v1016
        %1287 = vmatpush.msra.mxu0 %v1014
        %1288 = vmatpush.msra.mxu0 %v1012
        %1289 = vmatpush.msra.mxu0 %v1010
        %1290 = vmatpush.msra.mxu0 %v1008
        %1291 = vmatpush.msra.mxu0 %v1006
        %1292 = vmatpush.msra.mxu0 %v1004
        %1293 = vmatpush.msra.mxu0 %v1002
        %1294 = vmatpush.msra.mxu0 %v1000
        %1295 = vmatpush.msra.mxu0 %v998
        %1296 = vmatpush.msra.mxu0 %v996
        %1297 = vmatmul.f32.gmra.mxu0 %v984
        %v1298 = vpop.f32.mrf.mxu0
        %v1299 = vadd.f32 %v1230, %v1298
        %1300 = vmatmul.f32.gmra.mxu0 %v986
        %v1301 = vpop.f32.mrf.mxu0
        %v1302 = vadd.f32 %v1233, %v1301
        %1303 = vdwg.mxu0
        %1304 = vmatpush.msra.mxu0 %v1058
        %1305 = vmatpush.msra.mxu0 %v1056
        %1306 = vmatpush.msra.mxu0 %v1054
        %1307 = vmatpush.msra.mxu0 %v1052
        %1308 = vmatpush.msra.mxu0 %v1050
        %1309 = vmatpush.msra.mxu0 %v1048
        %1310 = vmatpush.msra.mxu0 %v1046
        %1311 = vmatpush.msra.mxu0 %v1044
        %1312 = vmatpush.msra.mxu0 %v1042
        %1313 = vmatpush.msra.mxu0 %v1040
        %1314 = vmatpush.msra.mxu0 %v1038
        %1315 = vmatpush.msra.mxu0 %v1036
        %1316 = vmatpush.msra.mxu0 %v1034
        %1317 = vmatpush.msra.mxu0 %v1032
        %1318 = vmatpush.msra.mxu0 %v1030
        %1319 = vmatpush.msra.mxu0 %v1028
        %1320 = vmatmul.f32.gmra.mxu0 %v985
        %v1321 = vpop.f32.mrf.mxu0
        %v1322 = vadd.f32 %v1299, %v1321
        %1323 = vmatmul.f32.gmra.mxu0 %v987
        %v1324 = vpop.f32.mrf.mxu0
        %v1325 = vadd.f32 %v1302, %v1324
        %1326 = vdwg.mxu0
        %v1327 = vld [vmem:[#allocation2 + $0x400] sm:$0xff]
        %v1328 = vld [vmem:[#allocation2 + $0x408] sm:$0xff]
        %v1329 = vld [vmem:[#allocation2 + $0x410] sm:$0xff]
        %v1330 = vld [vmem:[#allocation2 + $0x418] sm:$0xff]
        %v1331 = vld [vmem:[#allocation2 + $0x420] sm:$0xff]
        %v1332 = vld [vmem:[#allocation2 + $0x428] sm:$0xff]
        %v1333 = vld [vmem:[#allocation2 + $0x430] sm:$0xff]
        %v1334 = vld [vmem:[#allocation2 + $0x438] sm:$0xff]
        %v1335 = vld [vmem:[#allocation2 + $0x440] sm:$0xff]
        %v1336 = vld [vmem:[#allocation2 + $0x448] sm:$0xff]
        %v1337 = vld [vmem:[#allocation2 + $0x450] sm:$0xff]
        %v1338 = vld [vmem:[#allocation2 + $0x458] sm:$0xff]
        %v1339 = vld [vmem:[#allocation2 + $0x460] sm:$0xff]
        %v1340 = vld [vmem:[#allocation2 + $0x468] sm:$0xff]
        %v1341 = vld [vmem:[#allocation2 + $0x470] sm:$0xff]
        %v1342 = vld [vmem:[#allocation2 + $0x478] sm:$0xff]
        %v1343 = vld [vmem:[#allocation2 + $0x480] sm:$0xff]
        %v1344 = vld [vmem:[#allocation2 + $0x488] sm:$0xff]
        %v1345 = vld [vmem:[#allocation2 + $0x490] sm:$0xff]
        %v1346 = vld [vmem:[#allocation2 + $0x498] sm:$0xff]
        %v1347 = vld [vmem:[#allocation2 + $0x4a0] sm:$0xff]
        %v1348 = vld [vmem:[#allocation2 + $0x4a8] sm:$0xff]
        %v1349 = vld [vmem:[#allocation2 + $0x4b0] sm:$0xff]
        %v1350 = vld [vmem:[#allocation2 + $0x4b8] sm:$0xff]
        %v1351 = vld [vmem:[#allocation2 + $0x4c0] sm:$0xff]
        %v1352 = vld [vmem:[#allocation2 + $0x4c8] sm:$0xff]
        %v1353 = vld [vmem:[#allocation2 + $0x4d0] sm:$0xff]
        %v1354 = vld [vmem:[#allocation2 + $0x4d8] sm:$0xff]
        %v1355 = vld [vmem:[#allocation2 + $0x4e0] sm:$0xff]
        %v1356 = vld [vmem:[#allocation2 + $0x4e8] sm:$0xff]
        %v1357 = vld [vmem:[#allocation2 + $0x4f0] sm:$0xff]
        %v1358 = vld [vmem:[#allocation2 + $0x4f8] sm:$0xff]
        %v1359 = vld [vmem:[#allocation2 + $0x500] sm:$0xff]
        %v1360 = vld [vmem:[#allocation2 + $0x508] sm:$0xff]
        %v1361 = vld [vmem:[#allocation2 + $0x510] sm:$0xff]
        %v1362 = vld [vmem:[#allocation2 + $0x518] sm:$0xff]
        %v1363 = vld [vmem:[#allocation2 + $0x520] sm:$0xff]
        %v1364 = vld [vmem:[#allocation2 + $0x528] sm:$0xff]
        %v1365 = vld [vmem:[#allocation2 + $0x530] sm:$0xff]
        %v1366 = vld [vmem:[#allocation2 + $0x538] sm:$0xff]
        %v1367 = vld [vmem:[#allocation2 + $0x540] sm:$0xff]
        %v1368 = vld [vmem:[#allocation2 + $0x548] sm:$0xff]
        %v1369 = vld [vmem:[#allocation2 + $0x550] sm:$0xff]
        %v1370 = vld [vmem:[#allocation2 + $0x558] sm:$0xff]
        %v1371 = vld [vmem:[#allocation2 + $0x560] sm:$0xff]
        %v1372 = vld [vmem:[#allocation2 + $0x568] sm:$0xff]
        %v1373 = vld [vmem:[#allocation2 + $0x570] sm:$0xff]
        %v1374 = vld [vmem:[#allocation2 + $0x578] sm:$0xff]
        %v1375 = vld [vmem:[#allocation2 + $0x580] sm:$0xff]
        %v1376 = vld [vmem:[#allocation2 + $0x588] sm:$0xff]
        %v1377 = vld [vmem:[#allocation2 + $0x590] sm:$0xff]
        %v1378 = vld [vmem:[#allocation2 + $0x598] sm:$0xff]
        %v1379 = vld [vmem:[#allocation2 + $0x5a0] sm:$0xff]
        %v1380 = vld [vmem:[#allocation2 + $0x5a8] sm:$0xff]
        %v1381 = vld [vmem:[#allocation2 + $0x5b0] sm:$0xff]
        %v1382 = vld [vmem:[#allocation2 + $0x5b8] sm:$0xff]
        %v1383 = vld [vmem:[#allocation2 + $0x5c0] sm:$0xff]
        %v1384 = vld [vmem:[#allocation2 + $0x5c8] sm:$0xff]
        %v1385 = vld [vmem:[#allocation2 + $0x5d0] sm:$0xff]
        %v1386 = vld [vmem:[#allocation2 + $0x5d8] sm:$0xff]
        %v1387 = vld [vmem:[#allocation2 + $0x5e0] sm:$0xff]
        %v1388 = vld [vmem:[#allocation2 + $0x5e8] sm:$0xff]
        %v1389 = vld [vmem:[#allocation2 + $0x5f0] sm:$0xff]
        %v1390 = vld [vmem:[#allocation2 + $0x5f8] sm:$0xff]
        %v1391 = vrot.slane %v984, 2
        %v1392 = vrot.slane %v986, 2
        %v1393 = vsel %vm821, %v1391, %v1392
        %v1394 = vrot.slane %v985, 2
        %v1395 = vrot.slane %v987, 2
        %v1396 = vsel %vm821, %v1394, %v1395
        %v1397 = vrot.slane %v988, 2
        %v1398 = vsel %vm821, %v1392, %v1397
        %v1399 = vrot.slane %v989, 2
        %v1400 = vsel %vm821, %v1395, %v1399
        %1405 = vmatpush.msra.mxu0 %v1357
        %1406 = vmatpush.msra.mxu0 %v1355
        %1407 = vmatpush.msra.mxu0 %v1353
        %1408 = vmatpush.msra.mxu0 %v1351
        %1409 = vmatpush.msra.mxu0 %v1349
        %1410 = vmatpush.msra.mxu0 %v1347
        %1411 = vmatpush.msra.mxu0 %v1345
        %1412 = vmatpush.msra.mxu0 %v1343
        %1413 = vmatpush.msra.mxu0 %v1341
        %1414 = vmatpush.msra.mxu0 %v1339
        %1415 = vmatpush.msra.mxu0 %v1337
        %1416 = vmatpush.msra.mxu0 %v1335
        %1417 = vmatpush.msra.mxu0 %v1333
        %1418 = vmatpush.msra.mxu0 %v1331
        %1419 = vmatpush.msra.mxu0 %v1329
        %1420 = vmatpush.msra.mxu0 %v1327
        %1421 = vmatmul.f32.gmra.mxu0 %v1393
        %v1422 = vpop.f32.mrf.mxu0
        %v1423 = vadd.f32 0.0, %v1422
        %1424 = vmatmul.f32.gmra.mxu0 %v1398
        %v1425 = vpop.f32.mrf.mxu0
        %v1426 = vadd.f32 0.0, %v1425
        %1427 = vdwg.mxu0
        %1428 = vmatpush.msra.mxu0 %v1389
        %1429 = vmatpush.msra.mxu0 %v1387
        %1430 = vmatpush.msra.mxu0 %v1385
        %1431 = vmatpush.msra.mxu0 %v1383
        %1432 = vmatpush.msra.mxu0 %v1381
        %1433 = vmatpush.msra.mxu0 %v1379
        %1434 = vmatpush.msra.mxu0 %v1377
        %1435 = vmatpush.msra.mxu0 %v1375
        %1436 = vmatpush.msra.mxu0 %v1373
        %1437 = vmatpush.msra.mxu0 %v1371
        %1438 = vmatpush.msra.mxu0 %v1369
        %1439 = vmatpush.msra.mxu0 %v1367
        %1440 = vmatpush.msra.mxu0 %v1365
        %1441 = vmatpush.msra.mxu0 %v1363
        %1442 = vmatpush.msra.mxu0 %v1361
        %1443 = vmatpush.msra.mxu0 %v1359
        %1444 = vmatmul.f32.gmra.mxu0 %v1396
        %v1445 = vpop.f32.mrf.mxu0
        %v1446 = vadd.f32 %v1423, %v1445
        %1447 = vmatmul.f32.gmra.mxu0 %v1400
        %v1448 = vpop.f32.mrf.mxu0
        %v1449 = vadd.f32 %v1426, %v1448
        %1450 = vdwg.mxu0
        %1451 = vmatpush.msra.mxu0 %v1358
        %1452 = vmatpush.msra.mxu0 %v1356
        %1453 = vmatpush.msra.mxu0 %v1354
        %1454 = vmatpush.msra.mxu0 %v1352
        %1455 = vmatpush.msra.mxu0 %v1350
        %1456 = vmatpush.msra.mxu0 %v1348
        %1457 = vmatpush.msra.mxu0 %v1346
        %1458 = vmatpush.msra.mxu0 %v1344
        %1459 = vmatpush.msra.mxu0 %v1342
        %1460 = vmatpush.msra.mxu0 %v1340
        %1461 = vmatpush.msra.mxu0 %v1338
        %1462 = vmatpush.msra.mxu0 %v1336
        %1463 = vmatpush.msra.mxu0 %v1334
        %1464 = vmatpush.msra.mxu0 %v1332
        %1465 = vmatpush.msra.mxu0 %v1330
        %1466 = vmatpush.msra.mxu0 %v1328
        %1467 = vmatmul.f32.gmra.mxu0 %v1393
        %v1468 = vpop.f32.mrf.mxu0
        %v1469 = vadd.f32 0.0, %v1468
        %1470 = vmatmul.f32.gmra.mxu0 %v1398
        %v1471 = vpop.f32.mrf.mxu0
        %v1472 = vadd.f32 0.0, %v1471
        %1473 = vdwg.mxu0
        %1474 = vmatpush.msra.mxu0 %v1390
        %1475 = vmatpush.msra.mxu0 %v1388
        %1476 = vmatpush.msra.mxu0 %v1386
        %1477 = vmatpush.msra.mxu0 %v1384
        %1478 = vmatpush.msra.mxu0 %v1382
        %1479 = vmatpush.msra.mxu0 %v1380
        %1480 = vmatpush.msra.mxu0 %v1378
        %1481 = vmatpush.msra.mxu0 %v1376
        %1482 = vmatpush.msra.mxu0 %v1374
        %1483 = vmatpush.msra.mxu0 %v1372
        %1484 = vmatpush.msra.mxu0 %v1370
        %1485 = vmatpush.msra.mxu0 %v1368
        %1486 = vmatpush.msra.mxu0 %v1366
        %1487 = vmatpush.msra.mxu0 %v1364
        %1488 = vmatpush.msra.mxu0 %v1362
        %1489 = vmatpush.msra.mxu0 %v1360
        %1490 = vmatmul.f32.gmra.mxu0 %v1396
        %v1491 = vpop.f32.mrf.mxu0
        %v1492 = vadd.f32 %v1469, %v1491
        %1493 = vmatmul.f32.gmra.mxu0 %v1400
        %v1494 = vpop.f32.mrf.mxu0
        %v1495 = vadd.f32 %v1472, %v1494
        %1496 = vdwg.mxu0
        %v1497 = vadd.f32 %v1276, %v1446
        %v1498 = vadd.f32 %v1322, %v1492
        %v1499 = vadd.f32 %v1279, %v1449
        %v1500 = vadd.f32 %v1325, %v1495
        %v1502 = vperm.slane %v994, 0
        %v1503 = vperm.slane %v994, 1
        %v1506 = vadd.f32 %v1497, %v1502
        %v1507 = vadd.f32 %v1498, %v1503
        %v1508 = vadd.f32 %v1499, %v1502
        %v1509 = vadd.f32 %v1500, %v1503
        %v1510 = vld [vmem:[%s9] sm:$0xff]
        %v1511 = vld [vmem:[%s9 + $0x8] sm:$0xff]
        %v1512 = vld [vmem:[%s9 + $0x10] sm:$0xff]
        %v1513 = vld [vmem:[%s9 + $0x18] sm:$0xff]
        %v1514 = vld [vmem:[%s9 + $0x20] sm:$0xff]
        %v1515 = vld [vmem:[%s9 + $0x28] sm:$0xff]
        %v1516 = vld [vmem:[%s9 + $0x30] sm:$0xff]
        %v1517 = vld [vmem:[%s9 + $0x38] sm:$0xff]
        %v1518 = vld [vmem:[%s9 + $0x40] sm:$0xff]
        %v1519 = vld [vmem:[%s9 + $0x48] sm:$0xff]
        %v1520 = vld [vmem:[%s9 + $0x50] sm:$0xff]
        %v1521 = vld [vmem:[%s9 + $0x58] sm:$0xff]
        %v1522 = vld [vmem:[%s9 + $0x60] sm:$0xff]
        %v1523 = vld [vmem:[%s9 + $0x68] sm:$0xff]
        %v1524 = vld [vmem:[%s9 + $0x70] sm:$0xff]
        %v1525 = vld [vmem:[%s9 + $0x78] sm:$0xff]
        %v1526 = vld [vmem:[%s9 + $0x80] sm:$0xff]
        %v1527 = vld [vmem:[%s9 + $0x88] sm:$0xff]
        %v1528 = vld [vmem:[%s9 + $0x90] sm:$0xff]
        %v1529 = vld [vmem:[%s9 + $0x98] sm:$0xff]
        %v1530 = vld [vmem:[%s9 + $0xa0] sm:$0xff]
        %v1531 = vld [vmem:[%s9 + $0xa8] sm:$0xff]
        %v1532 = vld [vmem:[%s9 + $0xb0] sm:$0xff]
        %v1533 = vld [vmem:[%s9 + $0xb8] sm:$0xff]
        %v1534 = vld [vmem:[%s9 + $0xc0] sm:$0xff]
        %v1535 = vld [vmem:[%s9 + $0xc8] sm:$0xff]
        %v1536 = vld [vmem:[%s9 + $0xd0] sm:$0xff]
        %v1537 = vld [vmem:[%s9 + $0xd8] sm:$0xff]
        %v1538 = vld [vmem:[%s9 + $0xe0] sm:$0xff]
        %v1539 = vld [vmem:[%s9 + $0xe8] sm:$0xff]
        %v1540 = vld [vmem:[%s9 + $0xf0] sm:$0xff]
        %v1541 = vld [vmem:[%s9 + $0xf8] sm:$0xff]
        %1542 = vmatpush.msra.mxu0 %v1525
        %1543 = vmatpush.msra.mxu0 %v1524
        %1544 = vmatpush.msra.mxu0 %v1523
        %1545 = vmatpush.msra.mxu0 %v1522
        %1546 = vmatpush.msra.mxu0 %v1521
        %1547 = vmatpush.msra.mxu0 %v1520
        %1548 = vmatpush.msra.mxu0 %v1519
        %1549 = vmatpush.msra.mxu0 %v1518
        %1550 = vmatpush.msra.mxu0 %v1517
        %1551 = vmatpush.msra.mxu0 %v1516
        %1552 = vmatpush.msra.mxu0 %v1515
        %1553 = vmatpush.msra.mxu0 %v1514
        %1554 = vmatpush.msra.mxu0 %v1513
        %1555 = vmatpush.msra.mxu0 %v1512
        %1556 = vmatpush.msra.mxu0 %v1511
        %1557 = vmatpush.msra.mxu0 %v1510
        %1558 = vmatmul.f32.gmra.mxu0 %v1506
        %v1559 = vpop.f32.mrf.mxu0
        %v1560 = vadd.f32 0.0, %v1559
        %1561 = vmatmul.f32.gmra.mxu0 %v1508
        %v1562 = vpop.f32.mrf.mxu0
        %v1563 = vadd.f32 0.0, %v1562
        %1564 = vdwg.mxu0
        %1565 = vmatpush.msra.mxu0 %v1541
        %1566 = vmatpush.msra.mxu0 %v1540
        %1567 = vmatpush.msra.mxu0 %v1539
        %1568 = vmatpush.msra.mxu0 %v1538
        %1569 = vmatpush.msra.mxu0 %v1537
        %1570 = vmatpush.msra.mxu0 %v1536
        %1571 = vmatpush.msra.mxu0 %v1535
        %1572 = vmatpush.msra.mxu0 %v1534
        %1573 = vmatpush.msra.mxu0 %v1533
        %1574 = vmatpush.msra.mxu0 %v1532
        %1575 = vmatpush.msra.mxu0 %v1531
        %1576 = vmatpush.msra.mxu0 %v1530
        %1577 = vmatpush.msra.mxu0 %v1529
        %1578 = vmatpush.msra.mxu0 %v1528
        %1579 = vmatpush.msra.mxu0 %v1527
        %1580 = vmatpush.msra.mxu0 %v1526
        %1581 = vmatmul.f32.gmra.mxu0 %v1507
        %v1582 = vpop.f32.mrf.mxu0
        %v1583 = vadd.f32 %v1560, %v1582
        %1584 = vmatmul.f32.gmra.mxu0 %v1509
        %v1585 = vpop.f32.mrf.mxu0
        %v1586 = vadd.f32 %v1563, %v1585
        %1587 = vdwg.mxu0
        %vm1588 = vcmask 130048
        %v1589 = vsel %vm1588, %v1583, 0.0
        %v1590 = vsel %vm1588, %v1586, 0.0
        %v1591 = vadd.f32 %v1589, %v1590
        %v1592 = vrot.slane %v1591, 4
        %v1593 = vadd.f32 %v1591, %v1592
        %v1594 = vrot.slane %v1593, 2
        %v1595 = vadd.f32 %v1593, %v1594
        %v1596 = vrot.slane %v1595, 1
        %v1597 = vadd.f32 %v1595, %v1596
        %v1598 = vld [vmem:[%s5] sm:$0xff]
        %v1599 = vld [vmem:[%s5 + $0x8] sm:$0xff]
        %v1600 = vld [vmem:[%s6] sm:$0x1]
        %v1602 = vsel %vm1588, %v1597, 0
        %1604 = vmatpush.msra.mxu0 0.0
        %1605 = vmatpush.msra.mxu0 0.0
        %1606 = vmatpush.msra.mxu0 0.0
        %1607 = vmatpush.msra.mxu0 0.0
        %1608 = vmatpush.msra.mxu0 0.0
        %1609 = vmatpush.msra.mxu0 0.0
        %1610 = vmatpush.msra.mxu0 0.0
        %1611 = vmatpush.msra.mxu0 0.0
        %1612 = vmatpush.msra.mxu0 0.0
        %1613 = vmatpush.msra.mxu0 0.0
        %1614 = vmatpush.msra.mxu0 0.0
        %1615 = vmatpush.msra.mxu0 0.0
        %1616 = vmatpush.msra.mxu0 0.0
        %1617 = vmatpush.msra.mxu0 0.0
        %1618 = vmatpush.msra.mxu0 %v1599
        %1619 = vmatpush.msra.mxu0 %v1598
        %1620 = vmatmul.f32.gmra.mxu0 %v1602
        %v1621 = vpop.f32.mrf.mxu0
        %v1622 = vadd.f32 %v1600, %v1621
        %1623 = vdwg.mxu0
        %v1624 = vmax.f32 %v1622, 0.0
        %v1625 = vld [vmem:[%s7] sm:$0xf]
        %v1626 = vld [vmem:[%s8] sm:$0x1]
        %vm1627 = vcmask 31744
        %v1629 = vsel %vm1627, %v1624, 0
        %vm1631 = vcmask 1043456
        %v1633 = vsel %vm1631, %v1625, 0
        %1635 = vmatpush.msra.mxu0 0.0
        %1636 = vmatpush.msra.mxu0 0.0
        %1637 = vmatpush.msra.mxu0 0.0
        %1638 = vmatpush.msra.mxu0 0.0
        %1639 = vmatpush.msra.mxu0 0.0
        %1640 = vmatpush.msra.mxu0 0.0
        %1641 = vmatpush.msra.mxu0 0.0
        %1642 = vmatpush.msra.mxu0 0.0
        %1643 = vmatpush.msra.mxu0 0.0
        %1644 = vmatpush.msra.mxu0 0.0
        %1645 = vmatpush.msra.mxu0 0.0
        %1646 = vmatpush.msra.mxu0 0.0
        %1647 = vmatpush.msra.mxu0 0.0
        %1648 = vmatpush.msra.mxu0 0.0
        %1649 = vmatpush.msra.mxu0 0.0
        %1650 = vmatpush.msra.mxu0 %v1633
        %1651 = vmatmul.f32.gmra.mxu0 %v1629
        %v1652 = vpop.f32.mrf.mxu0
        %v1653 = vadd.f32 %v1626, %v1652
        %1654 = vdwg.mxu0
        %v1655 = vxor.u32 %v1653, 2147483648
        %v1656 = vmul.f32 %v1655, 1.442695
        %v1657 = vpow.pop %v1656
        %v1658 = vadd.f32 %v1657, 1.0
        %v1659 = vrcp.pop %v1658
        %v1660 = vmul.f32 %v1658, %v1659
        %v1661 = vsub.f32 1.0, %v1660
        %v1662 = vmul.f32 %v1659, %v1661
        %v1663 = vadd.f32 %v1659, %v1662
        %vm1664 = vweird.f32 %v1658
        %vm1665 = vweird.f32 %v1659
        %vm1666 = vmor %vm1664, %vm1665
        %v1667 = vsel %vm1666, %v1659, %v1663
        %v1668 = vand.u32 2147483647, %v1658
        %vm1669 = vcmp.eq.f32.partialorder %v1668, 8.507059e+37
        %v1670 = vand.u32 %v1658, 2147483648
        %v1671 = vor.u32 1.1754944e-38, %v1670
        %v1672 = vsel %vm1669, %v1671, %v1667
        %v1673 = vmul.f32 1.0, %v1672
        %v1674 = vld [vmem:[%s10] sm:$0xff]
        %v1675 = vld [vmem:[%s10 + $0x8] sm:$0xff]
        %v1676 = vld [vmem:[%s10 + $0x10] sm:$0xff]
        %v1677 = vld [vmem:[%s10 + $0x18] sm:$0xff]
        %v1679 = vsel %vm1588, %v1673, 0
        %1681 = vmatpush.msra.mxu0 0.0
        %1682 = vmatpush.msra.mxu0 0.0
        %1683 = vmatpush.msra.mxu0 0.0
        %1684 = vmatpush.msra.mxu0 0.0
        %1685 = vmatpush.msra.mxu0 0.0
        %1686 = vmatpush.msra.mxu0 0.0
        %1687 = vmatpush.msra.mxu0 0.0
        %1688 = vmatpush.msra.mxu0 0.0
        %1689 = vmatpush.msra.mxu0 0.0
        %1690 = vmatpush.msra.mxu0 0.0
        %1691 = vmatpush.msra.mxu0 0.0
        %1692 = vmatpush.msra.mxu0 0.0
        %1693 = vmatpush.msra.mxu0 0.0
        %1694 = vmatpush.msra.mxu0 0.0
        %1695 = vmatpush.msra.mxu0 %v1676
        %1696 = vmatpush.msra.mxu0 %v1674
        %1697 = vmatmul.f32.gmra.mxu0 %v1679
        %v1698 = vpop.f32.mrf.mxu0
        %v1699 = vadd.f32 0.0, %v1698
        %1700 = vdwg.mxu0
        %1701 = vmatpush.msra.mxu0 0.0
        %1702 = vmatpush.msra.mxu0 0.0
        %1703 = vmatpush.msra.mxu0 0.0
        %1704 = vmatpush.msra.mxu0 0.0
        %1705 = vmatpush.msra.mxu0 0.0
        %1706 = vmatpush.msra.mxu0 0.0
        %1707 = vmatpush.msra.mxu0 0.0
        %1708 = vmatpush.msra.mxu0 0.0
        %1709 = vmatpush.msra.mxu0 0.0
        %1710 = vmatpush.msra.mxu0 0.0
        %1711 = vmatpush.msra.mxu0 0.0
        %1712 = vmatpush.msra.mxu0 0.0
        %1713 = vmatpush.msra.mxu0 0.0
        %1714 = vmatpush.msra.mxu0 0.0
        %1715 = vmatpush.msra.mxu0 %v1677
        %1716 = vmatpush.msra.mxu0 %v1675
        %1717 = vmatmul.f32.gmra.mxu0 %v1679
        %v1718 = vpop.f32.mrf.mxu0
        %v1719 = vadd.f32 0.0, %v1718
        %1720 = vdwg.mxu0
        %v1721 = vperm.slane %v1699, 0
        %v1722 = vperm.slane %v1719, 0
        %v1723 = vmul.f32 %v1506, %v1721
        %v1724 = vmul.f32 %v1507, %v1722
        %v1725 = vmul.f32 %v1508, %v1721
        %v1726 = vmul.f32 %v1509, %v1722
        %v1727 = vadd.f32 %v1723, %v824
        %v1728 = vadd.f32 %v1724, %v827
        %v1729 = vadd.f32 %v1725, %v829
        %v1730 = vadd.f32 %v1726, %v831
        %1731 = vst [vmem:[%s377] sm:$0xff] %v1727
        %1732 = vst [vmem:[%s377 + $0x8] sm:$0xff] %v1728
        %1733 = vst [vmem:[%s377 + $0x10] sm:$0xff] %v1729
        %1734 = vst [vmem:[%s377 + $0x18] sm:$0xff] %v1730
        %p1735 = scmp.lt.s32.totalorder %s23, 1
        %s1736 = scalar_select %p1735, %s23, 1
        %s1737 = smul.addr %s1736, 4
        %s1738 = smul.addr %s1737, 8
        %s1739 = scalar_lea.vmem %s11, %s1738
        // Predicated region
        $region69: #{rcab_forward.1} parent=59 // pred_check
          %p1740 = pneg %p256
        $region70: #{rcab_forward.1} parent=59 // pred_check_branch
          %1742 = sbr.rel (%p1740) target = $region72
        $region71: #{rcab_forward.1} parent=59 // pred_region
          _
        $region72: #{rcab_forward.1} parent=59 // pred_fallthru
          _
      $region60: #{rcab_forward.1} parent=5 // pred_fallthru
        _
      %p1743 = scmp.le.s32.totalorder 2, %s18
      // Predicated region
      $region73: #{rcab_forward.1} parent=5 // pred_check
        %p1744 = pneg %p1743
      $region74: #{rcab_forward.1} parent=5 // pred_check_branch
        %1746 = sbr.rel (%p1744) target = $region76
      $region75: #{rcab_forward.1} parent=5 // pred_region
        %s1747 = ssub.s32 %s18, 2
        // Predicated region
        $region77: #{rcab_forward.1} parent=75 // pred_check
          %p1748 = pneg %p262
        $region78: #{rcab_forward.1} parent=75 // pred_check_branch
          %1750 = sbr.rel (%p1748) target = $region80
        $region79: #{rcab_forward.1} parent=75 // pred_region
          %p1751 = scmp.lt.s32.totalorder %s24, 1
          %s1752 = scalar_select %p1751, %s24, 1
          %s1753 = smul.addr %s1752, 4
          %s1754 = smul.addr %s1753, 8
          %s1755 = scalar_lea.vmem %s11, %s1754
        $region80: #{rcab_forward.1} parent=75 // pred_fallthru
          _
      $region76: #{rcab_forward.1} parent=5 // pred_fallthru
        _
    $region6: #{rcab_forward.1} parent=1 // loop_footer
      %s22 = sadd.s32 1, %s18
    $region7: #{rcab_forward.1} parent=1 // loop_footer_branch
      %17 = sbr.rel target = $region3
    $region8: #{rcab_forward.1} parent=1 // loop_exit
      _
    %1756 = vsyncpa [#allocation5], 1
    %s1757 = scalar_lea.sflag [#allocation5], 1
    %1758 = vsyncpa %s1757, 1
  %1759 = vsyncmov [#allocation3]
  %s1760 = vpop.sfrf %1759
  %p1761 = scmp.eq.s32.totalorder %s1760, 0
  %p1762 = pneg %p1761
  %1764 = shalt.err (%p1762)

</llo_original>
